<compile_context>
chip_gen: v7x
topology: tpu7x:2x2x1
jax: 0.10.0
libtpu: 0.0.40
codegen_flags: <defaults>
</compile_context>

<pallas_src>
import jax
import jax.numpy as jnp
from jax import lax
from jax.experimental import pallas as pl
from jax.experimental.pallas import tpu as pltpu


def _make_mlp_kernel(num_linear_layers, compute_dtype):
    """Fused transposed-layout MLP kernel.

    Refs: (x, w1, b1, ..., wL, bL, out) with
      x:   (batch_tile, input_dim)           -- batch on sublanes (as stored)
      w_l: (out_l, in_l)  in compute_dtype   -- PyTorch layout, grid-resident
      b_l: (out_l, 1)     f32                -- grid-resident
      out: (1, batch_tile)                   -- lane-dense result row
    """
    f32 = compute_dtype == jnp.float32
    precision = lax.Precision.HIGHEST if f32 else None

    def kernel(*refs):
        x_ref = refs[0]
        out_ref = refs[-1]
        p = refs[1:-1]  # alternating (w, b) pairs

        x = x_ref[...].astype(compute_dtype)            # (bt, in)
        w0 = p[0][...]                                   # (h0, in), compute_dtype
        b0 = p[1][...]                                   # (h0, 1), f32
        # Contract x's feature axis with w0's "in" axis -> (h0, bt):
        # batch lands on the lane axis, no transposed x copy needed.
        h = lax.dot_general(
            w0, x, (((1,), (1,)), ((), ())),
            preferred_element_type=jnp.float32, precision=precision) + b0

        for li in range(1, num_linear_layers):
            h = jnp.maximum(h, 0.0)                      # ReLU (Dropout = identity in eval)
            h = h.astype(compute_dtype)
            w = p[2 * li][...]                           # (out, in), compute_dtype
            b = p[2 * li + 1][...]                       # (out, 1), f32
            h = jnp.dot(w, h, preferred_element_type=jnp.float32,
                        precision=precision) + b

        out_ref[...] = h.astype(out_ref.dtype)           # (1, bt) lane-dense store

    return kernel


def _choose_batch_tile(B, input_dim, hidden_dims, compute_itemsize,
                       budget_bytes=12 << 20, max_tile=4096):
    """Padding-aware batch-tile choice (multiple of 128, fits scoped VMEM)."""
    dims = [input_dim] + list(hidden_dims) + [1]

    def pad_to(n, m):
        return -(-n // m) * m

    # Grid-resident weights/biases (count double-buffered to be conservative).
    resident = 0
    for i in range(len(dims) - 1):
        resident += pad_to(dims[i + 1], 8) * pad_to(dims[i], 128) * compute_itemsize * 2
        resident += pad_to(dims[i + 1], 8) * 128 * 4 * 2
    budget = max(budget_bytes - resident, 1 << 20)

    widest = max(dims)

    def tile_bytes(bt):
        x_buf = bt * pad_to(input_dim, 128) * 4 * 2      # x block: 128-lane padded, 2 bufs
        o_buf = 8 * bt * 4 * 2                           # (1, bt) out: sublane padded, 2 bufs
        act = 2 * pad_to(widest, 8) * bt * 4             # two live f32 intermediates
        return x_buf + o_buf + act

    bt = 128
    while bt * 2 <= max_tile and tile_bytes(bt * 2) <= budget:
        bt *= 2

    b_pad = pad_to(B, 128)
    if b_pad >= 256:
        # Keep at least 2 grid steps so the parallel axis can shard across
        # v7x's two TensorCores (and software pipelining has work to overlap).
        bt = min(bt, max(128, pad_to(b_pad // 2, 128)))
    else:
        bt = 128
    return bt


def nnf_forward(x, params, *, batch_tile=None, bf16_matmul=False):
    """Run the fused MLP forward pass via pallas_call.

    x:      (B, input_dim) float32
    params: list of (W, b) in PyTorch layout: W (out, in), b (out,)
    returns (B, 1) float32
    """
    B, input_dim = x.shape
    num_layers = len(params)
    hidden_dims = [w.shape[0] for w, _ in params[:-1]]
    out_dim = params[-1][0].shape[0]
    assert out_dim == 1, out_dim

    compute_dtype = jnp.bfloat16 if bf16_matmul else jnp.float32
    itemsize = jnp.dtype(compute_dtype).itemsize

    if batch_tile is None:
        batch_tile = _choose_batch_tile(B, input_dim, hidden_dims, itemsize)
    # Lane-dense output row requires a 128-multiple tile.
    bt = -(-batch_tile // 128) * 128

    # Pad batch to a multiple of the tile (zero rows; sliced off afterwards).
    b_pad = -(-B // bt) * bt
    x_in = x if b_pad == B else jnp.pad(x, ((0, b_pad - B), (0, 0)))
    grid = (b_pad // bt,)

    flat_inputs = [x_in]
    in_specs = [pl.BlockSpec((bt, input_dim), lambda i: (i, 0))]
    for w, b in params:
        # Cast ONCE in the wrapper; the kernel never re-casts resident weights.
        w_in = w.astype(compute_dtype)
        b_in = b.reshape(-1, 1).astype(jnp.float32)      # (out, 1) broadcasts over lanes
        flat_inputs.append(w_in)
        flat_inputs.append(b_in)
        # Constant block index across the grid -> resident in VMEM, no re-DMA.
        in_specs.append(pl.BlockSpec(w_in.shape, lambda i: (0, 0)))
        in_specs.append(pl.BlockSpec(b_in.shape, lambda i: (0, 0)))

    out_spec = pl.BlockSpec((1, bt), lambda i: (0, i))   # lane-dense (1, bt) blocks

    kernel = _make_mlp_kernel(num_layers, compute_dtype)

    # Advisory cost estimate (kernel is HBM-bound on the x stream).
    flops = 2 * b_pad * sum(w.shape[0] * w.shape[1] for w, _ in params)
    param_bytes = sum(w.size * itemsize + b.size * 4 for w, b in params)
    bytes_accessed = x_in.size * x_in.dtype.itemsize + b_pad * 4 + param_bytes
    cost = pl.CostEstimate(flops=flops, transcendentals=0,
                           bytes_accessed=bytes_accessed)

    out_row = pl.pallas_call(
        kernel,
        out_shape=jax.ShapeDtypeStruct((1, b_pad), jnp.float32),
        grid_spec=pltpu.PrefetchScalarGridSpec(
            num_scalar_prefetch=0,
            grid=grid,
            in_specs=in_specs,
            out_specs=out_spec,
        ),
        compiler_params=pltpu.CompilerParams(
            dimension_semantics=("parallel",),
        ),
        cost_estimate=cost,
    )(*flat_inputs)

    # (1, b_pad) -> (b_pad, 1) is a pure reshape (no transpose); drop padding.
    return out_row.reshape(-1, 1)[:B]


def init_params(key, input_dim, hidden_dims):
    """Deterministic parameter init matching nn.Linear shapes: W (out, in), b (out,)."""
    dims = [input_dim] + list(hidden_dims) + [1]
    params = []
    for i in range(len(dims) - 1):
        key, kw, kb = jax.random.split(key, 3)
        fan_in = dims[i]
        bound = 1.0 / jnp.sqrt(fan_in)
        w = jax.random.uniform(kw, (dims[i + 1], dims[i]), jnp.float32, -bound, bound)
        b = jax.random.uniform(kb, (dims[i + 1],), jnp.float32, -bound, bound)
        params.append((w, b))
    return params


def reference_forward(x, params):
    """Plain-JAX f32 reference of the same forward pass (eval-mode dropout)."""
    h = x.astype(jnp.float32)
    n = len(params)
    for li, (w, b) in enumerate(params):
        h = jnp.dot(h, w.T, preferred_element_type=jnp.float32,
                    precision=lax.Precision.HIGHEST) + b
        if li != n - 1:
            h = jnp.maximum(h, 0.0)
    return h


if __name__ == "__main__":
    input_dim = 16
    hidden_dims = [32, 32]
    batch = 200  # not a multiple of 128: exercises padding + a 2-step pipelined grid

    key = jax.random.PRNGKey(0)
    key, kx = jax.random.split(key)
    x = jax.random.normal(kx, (batch, input_dim), jnp.float32)
    params = init_params(key, input_dim, hidden_dims)

    # Default: auto tile, f32 matmuls (matches the PyTorch reference).
    out_f32 = jax.block_until_ready(nnf_forward(x, params))
    # Opt-in bf16 path (weights pre-cast in the wrapper, activations cast in-kernel).
    out_bf16 = jax.block_until_ready(nnf_forward(x, params, bf16_matmul=True))

    ref = reference_forward(x, params)

    assert out_f32.shape == (batch, 1), out_f32.shape
    assert out_bf16.shape == (batch, 1), out_bf16.shape
    assert jnp.allclose(out_f32, ref, atol=1e-4, rtol=1e-4), (
        float(jnp.max(jnp.abs(out_f32 - ref))))
    assert jnp.allclose(out_bf16, ref, atol=5e-2, rtol=5e-2), (
        float(jnp.max(jnp.abs(out_bf16 - ref))))

    print("KERNEL_OK")
</pallas_src>

<mosaic_0001>
module attributes {stable_mosaic.version = 11 : i64} {
  func.func @kernel(%arg0: i32, %arg1: memref<128x16xf32, #tpu.memory_space<vmem>>, %arg2: memref<32x16xf32, #tpu.memory_space<vmem>>, %arg3: memref<32x1xf32, #tpu.memory_space<vmem>>, %arg4: memref<32x32xf32, #tpu.memory_space<vmem>>, %arg5: memref<32x1xf32, #tpu.memory_space<vmem>>, %arg6: memref<1x32xf32, #tpu.memory_space<vmem>>, %arg7: memref<1x1xf32, #tpu.memory_space<vmem>>, %arg8: memref<1x128xf32, #tpu.memory_space<vmem>>) attributes {dimension_semantics = [#tpu.dimension_semantics<parallel>], iteration_bounds = array<i64: 2>, scalar_prefetch = 0 : i64, scratch_operands = 0 : i64, tpu.core_type = #tpu.core_type<tc>, window_params = [{transform_indices = @transform_0, window_bounds = array<i64: 128, 16>}, {pipeline_mode = #tpu.pipeline_mode<synchronous>, transform_indices = @transform_1, window_bounds = array<i64: 32, 16>}, {pipeline_mode = #tpu.pipeline_mode<synchronous>, transform_indices = @transform_2, window_bounds = array<i64: 32, 1>}, {pipeline_mode = #tpu.pipeline_mode<synchronous>, transform_indices = @transform_3, window_bounds = array<i64: 32, 32>}, {pipeline_mode = #tpu.pipeline_mode<synchronous>, transform_indices = @transform_4, window_bounds = array<i64: 32, 1>}, {pipeline_mode = #tpu.pipeline_mode<synchronous>, transform_indices = @transform_5, window_bounds = array<i64: 1, 32>}, {pipeline_mode = #tpu.pipeline_mode<synchronous>, transform_indices = @transform_6, window_bounds = array<i64: 1, 1>}, {transform_indices = @transform_7, window_bounds = array<i64: 1, 128>}]} {
    %c0 = arith.constant 0 : index
    %c0_0 = arith.constant 0 : index
    %0 = vector.load %arg1[%c0, %c0_0] : memref<128x16xf32, #tpu.memory_space<vmem>>, vector<128x16xf32>
    %c0_1 = arith.constant 0 : index
    %c0_2 = arith.constant 0 : index
    %1 = vector.load %arg2[%c0_1, %c0_2] : memref<32x16xf32, #tpu.memory_space<vmem>>, vector<32x16xf32>
    %c0_3 = arith.constant 0 : index
    %c0_4 = arith.constant 0 : index
    %2 = vector.load %arg3[%c0_3, %c0_4] : memref<32x1xf32, #tpu.memory_space<vmem>>, vector<32x1xf32>
    %cst = arith.constant dense<0.000000e+00> : vector<32x128xf32>
    %3 = tpu.matmul %1, %0, %cst {dimension_numbers = #tpu.dot_dimension_numbers<[1], [1], [0], [0], [0, 0, 1, 0], [], []>, precision = #tpu.contract_precision<fp32>} : vector<32x16xf32>, vector<128x16xf32>, vector<32x128xf32> -> vector<32x128xf32>
    %4 = vector.broadcast %2 : vector<32x1xf32> to vector<32x128xf32>
    %5 = arith.addf %3, %4 : vector<32x128xf32>
    %cst_5 = arith.constant 0.000000e+00 : f32
    %6 = vector.broadcast %cst_5 : f32 to vector<32x128xf32>
    %7 = arith.maximumf %5, %6 : vector<32x128xf32>
    %c0_6 = arith.constant 0 : index
    %c0_7 = arith.constant 0 : index
    %8 = vector.load %arg4[%c0_6, %c0_7] : memref<32x32xf32, #tpu.memory_space<vmem>>, vector<32x32xf32>
    %c0_8 = arith.constant 0 : index
    %c0_9 = arith.constant 0 : index
    %9 = vector.load %arg5[%c0_8, %c0_9] : memref<32x1xf32, #tpu.memory_space<vmem>>, vector<32x1xf32>
    %cst_10 = arith.constant dense<0.000000e+00> : vector<32x128xf32>
    %10 = tpu.matmul %8, %7, %cst_10 {dimension_numbers = #tpu.dot_dimension_numbers<[1], [0], [0], [1], [0, 0, 1, 1], [], []>, precision = #tpu.contract_precision<fp32>} : vector<32x32xf32>, vector<32x128xf32>, vector<32x128xf32> -> vector<32x128xf32>
    %11 = vector.broadcast %9 : vector<32x1xf32> to vector<32x128xf32>
    %12 = arith.addf %10, %11 : vector<32x128xf32>
    %cst_11 = arith.constant 0.000000e+00 : f32
    %13 = vector.broadcast %cst_11 : f32 to vector<32x128xf32>
    %14 = arith.maximumf %12, %13 : vector<32x128xf32>
    %c0_12 = arith.constant 0 : index
    %c0_13 = arith.constant 0 : index
    %15 = vector.load %arg6[%c0_12, %c0_13] : memref<1x32xf32, #tpu.memory_space<vmem>>, vector<1x32xf32>
    %c0_14 = arith.constant 0 : index
    %c0_15 = arith.constant 0 : index
    %16 = vector.load %arg7[%c0_14, %c0_15] : memref<1x1xf32, #tpu.memory_space<vmem>>, vector<1x1xf32>
    %cst_16 = arith.constant dense<0.000000e+00> : vector<1x128xf32>
    %17 = tpu.matmul %15, %14, %cst_16 {dimension_numbers = #tpu.dot_dimension_numbers<[1], [0], [0], [1], [0, 0, 1, 1], [], []>, precision = #tpu.contract_precision<fp32>} : vector<1x32xf32>, vector<32x128xf32>, vector<1x128xf32> -> vector<1x128xf32>
    %18 = vector.broadcast %16 : vector<1x1xf32> to vector<1x128xf32>
    %19 = arith.addf %17, %18 : vector<1x128xf32>
    %c0_17 = arith.constant 0 : index
    %c0_18 = arith.constant 0 : index
    %20 = vector.load %arg8[%c0_17, %c0_18] : memref<1x128xf32, #tpu.memory_space<vmem>>, vector<1x128xf32>
    tpu.vector_store %arg8[%c0_17, %c0_18], %19 {strides = array<i32>} : memref<1x128xf32, #tpu.memory_space<vmem>>, vector<1x128xf32>,
    return
  }
  func.func @transform_0(%arg0: i32) -> (i32, i32) {
    %c0_i32 = arith.constant 0 : i32
    %c0_i32_0 = arith.constant 0 : i32
    return %arg0, %c0_i32 : i32, i32
  }
  func.func @transform_1(%arg0: i32) -> (i32, i32) {
    %c0_i32 = arith.constant 0 : i32
    %c0_i32_0 = arith.constant 0 : i32
    %c0_i32_1 = arith.constant 0 : i32
    return %c0_i32, %c0_i32_0 : i32, i32
  }
  func.func @transform_2(%arg0: i32) -> (i32, i32) {
    %c0_i32 = arith.constant 0 : i32
    %c0_i32_0 = arith.constant 0 : i32
    %c0_i32_1 = arith.constant 0 : i32
    return %c0_i32, %c0_i32_0 : i32, i32
  }
  func.func @transform_3(%arg0: i32) -> (i32, i32) {
    %c0_i32 = arith.constant 0 : i32
    %c0_i32_0 = arith.constant 0 : i32
    %c0_i32_1 = arith.constant 0 : i32
    return %c0_i32, %c0_i32_0 : i32, i32
  }
  func.func @transform_4(%arg0: i32) -> (i32, i32) {
    %c0_i32 = arith.constant 0 : i32
    %c0_i32_0 = arith.constant 0 : i32
    %c0_i32_1 = arith.constant 0 : i32
    return %c0_i32, %c0_i32_0 : i32, i32
  }
  func.func @transform_5(%arg0: i32) -> (i32, i32) {
    %c0_i32 = arith.constant 0 : i32
    %c0_i32_0 = arith.constant 0 : i32
    %c0_i32_1 = arith.constant 0 : i32
    return %c0_i32, %c0_i32_0 : i32, i32
  }
  func.func @transform_6(%arg0: i32) -> (i32, i32) {
    %c0_i32 = arith.constant 0 : i32
    %c0_i32_0 = arith.constant 0 : i32
    %c0_i32_1 = arith.constant 0 : i32
    return %c0_i32, %c0_i32_0 : i32, i32
  }
  func.func @transform_7(%arg0: i32) -> (i32, i32) {
    %c0_i32 = arith.constant 0 : i32
    %c0_i32_0 = arith.constant 0 : i32
    return %c0_i32, %arg0 : i32, i32
  }
}

</mosaic_0001>

<llo_original>
// kernel: tpu_custom_call.1
$region0: #{tpu_custom_call.1}
  #allocation0 [shape = 'u32[]', space=smem, size = 0x4, offset = 0x4, fixed_abs, tag = 'smem constant byte address 0x4 - core index']
  #allocation1 [shape = 'u32[144,128]{1,0:T(1,128)}', space=vmem, size = 0x12000, scoped, tag = 'internal scratch']
  #allocation2 [shape = 'f32[1,1]{1,0:T(1,128)S(1)}', space=vmem, size = 0x200, scoped, tag = 'scoped memory for tpu_custom_call.1']
  %s0 = inlined_call_operand.vmem [shape: f32[256,16], index: 0, kind: input, shape index: {}]
  %s1 = inlined_call_operand.vmem [shape: f32[32,16], index: 1, kind: input, shape index: {}]
  %s2 = inlined_call_operand.vmem [shape: f32[32,1], index: 2, kind: input, shape index: {}]
  %s3 = inlined_call_operand.vmem [shape: f32[32,32], index: 3, kind: input, shape index: {}]
  %s4 = inlined_call_operand.vmem [shape: f32[32,1], index: 4, kind: input, shape index: {}]
  %s5 = inlined_call_operand.vmem [shape: f32[1,32], index: 5, kind: input, shape index: {}]
  %s6 = inlined_call_operand.<no memory space> [shape: f32[1,1], index: 6, kind: input, shape index: {}]
  %s7 = inlined_call_operand.hbm [shape: f32[1,256], index: 7, kind: output, shape index: {}]
  %s8 = sld [smem:[#allocation0]]
  $region61: #{tpu_custom_call.1} parent=0
    _
  %s10 = ssub.s32 1, %s8
  %s11 = scalar_select 0, %s10, %s8
  %v12 = vstv %s6
  %13 = vst [vmem:[#allocation2] sm:$0x1] %v12
  $region1: #{tpu_custom_call.1} parent=0
    #allocation3 [shape = 'u8[1024]{0}', space=vmem, size = 0x400, scoped, tag = 'output window, operand 0']
    #allocation4 [shape = 's32[2]{0}', space=sflag, size = 0x8, scoped, tag = 'scoped memory for tpu_custom_call.1']
    %14 = vsyncpa [#allocation4], 0
    %s15 = scalar_lea.sflag [#allocation4], 1
    %16 = vsyncpa %s15, 0
    loop: start=0, step=1, limit=4
    $region2: #{tpu_custom_call.1} parent=1 // loop_pre_header
      _
    $region3: #{tpu_custom_call.1} parent=1 // loop_header
      %s18 = sphi 0, %s22
      %p19 = scmp.ge.s32.totalorder %s18, 4
      %s28 = sphi 0, %s30
      %s31 = sphi 0, %s28
      %s32 = sphi 0, %s31
      %s48 = sphi 0, %s32
      %s52 = sphi 0, %s52
      %s54 = sphi 0, %s52
      %s55 = sphi 0, %s54
      %s69 = sphi 0, %s55
      %s73 = sphi 0, %s73
      %s75 = sphi 0, %s73
      %s76 = sphi 0, %s75
      %s90 = sphi 0, %s76
      %s94 = sphi 0, %s94
      %s96 = sphi 0, %s94
      %s97 = sphi 0, %s96
      %s111 = sphi 0, %s97
      %s115 = sphi 0, %s115
      %s117 = sphi 0, %s115
      %s118 = sphi 0, %s117
      %s132 = sphi 0, %s118
      %s136 = sphi 0, %s136
      %s138 = sphi 0, %s136
      %s139 = sphi 0, %s138
      %s153 = sphi 0, %s139
      %s157 = sphi 0, %s157
      %s159 = sphi 0, %s157
      %s160 = sphi 0, %s159
      %s174 = sphi 0, %s160
      %s180 = sphi 0, %s182
      %s183 = sphi 0, %s180
      %s184 = sphi 0, %s183
      %s200 = sphi 0, %s184
    $region4: #{tpu_custom_call.1} parent=1 // loop_header_branch
      %21 = sbr.rel (%p19) target = $region8
    $region5: #{tpu_custom_call.1} parent=1 // loop_body
      %s23 = ssub.s32 %s18, 1
      %s24 = ssub.s32 %s18, 2
      %s25 = sadd.s32 %s18, 1
      %s26 = ssub.s32 %s18, %s25
      %p27 = scmp.eq.s32.totalorder %s26, 0
      %s29 = sadd.s32 %s28, 1
      %s30 = scalar_select %p27, %s28, %s29
      %p33 = pneg %p27
      %p34 = scmp.eq.s32.totalorder %s18, 1
      %p35 = por %p33, %p34
      %p36 = scmp.ne.s32.totalorder %s28, %s31
      %p37 = scmp.eq.s32.totalorder %s18, 0
      %p38 = por %p36, %p37
      %p39 = scmp.ne.s32.totalorder %s28, %s31
      %p40 = scmp.eq.s32.totalorder %s23, 1
      %p41 = por %p39, %p40
      %p42 = scmp.ne.s32.totalorder %s31, %s32
      %p43 = scmp.eq.s32.totalorder %s23, 0
      %p44 = por %p42, %p43
      %p45 = scmp.ne.s32.totalorder %s31, %s32
      %p46 = scmp.eq.s32.totalorder %s24, 1
      %p47 = por %p45, %p46
      %p49 = scmp.ne.s32.totalorder %s32, %s48
      %p50 = scmp.eq.s32.totalorder %s24, 0
      %p51 = por %p49, %p50
      %s53 = sadd.s32 %s52, 1
      %p56 = scmp.eq.s32.totalorder %s18, 1
      %p57 = scmp.ne.s32.totalorder %s52, %s54
      %p58 = scmp.eq.s32.totalorder %s18, 0
      %p59 = por %p57, %p58
      %p60 = scmp.ne.s32.totalorder %s52, %s54
      %p61 = scmp.eq.s32.totalorder %s23, 1
      %p62 = por %p60, %p61
      %p63 = scmp.ne.s32.totalorder %s54, %s55
      %p64 = scmp.eq.s32.totalorder %s23, 0
      %p65 = por %p63, %p64
      %p66 = scmp.ne.s32.totalorder %s54, %s55
      %p67 = scmp.eq.s32.totalorder %s24, 1
      %p68 = por %p66, %p67
      %p70 = scmp.ne.s32.totalorder %s55, %s69
      %p71 = scmp.eq.s32.totalorder %s24, 0
      %p72 = por %p70, %p71
      %s74 = sadd.s32 %s73, 1
      %p77 = scmp.eq.s32.totalorder %s18, 1
      %p78 = scmp.ne.s32.totalorder %s73, %s75
      %p79 = scmp.eq.s32.totalorder %s18, 0
      %p80 = por %p78, %p79
      %p81 = scmp.ne.s32.totalorder %s73, %s75
      %p82 = scmp.eq.s32.totalorder %s23, 1
      %p83 = por %p81, %p82
      %p84 = scmp.ne.s32.totalorder %s75, %s76
      %p85 = scmp.eq.s32.totalorder %s23, 0
      %p86 = por %p84, %p85
      %p87 = scmp.ne.s32.totalorder %s75, %s76
      %p88 = scmp.eq.s32.totalorder %s24, 1
      %p89 = por %p87, %p88
      %p91 = scmp.ne.s32.totalorder %s76, %s90
      %p92 = scmp.eq.s32.totalorder %s24, 0
      %p93 = por %p91, %p92
      %s95 = sadd.s32 %s94, 1
      %p98 = scmp.eq.s32.totalorder %s18, 1
      %p99 = scmp.ne.s32.totalorder %s94, %s96
      %p100 = scmp.eq.s32.totalorder %s18, 0
      %p101 = por %p99, %p100
      %p102 = scmp.ne.s32.totalorder %s94, %s96
      %p103 = scmp.eq.s32.totalorder %s23, 1
      %p104 = por %p102, %p103
      %p105 = scmp.ne.s32.totalorder %s96, %s97
      %p106 = scmp.eq.s32.totalorder %s23, 0
      %p107 = por %p105, %p106
      %p108 = scmp.ne.s32.totalorder %s96, %s97
      %p109 = scmp.eq.s32.totalorder %s24, 1
      %p110 = por %p108, %p109
      %p112 = scmp.ne.s32.totalorder %s97, %s111
      %p113 = scmp.eq.s32.totalorder %s24, 0
      %p114 = por %p112, %p113
      %s116 = sadd.s32 %s115, 1
      %p119 = scmp.eq.s32.totalorder %s18, 1
      %p120 = scmp.ne.s32.totalorder %s115, %s117
      %p121 = scmp.eq.s32.totalorder %s18, 0
      %p122 = por %p120, %p121
      %p123 = scmp.ne.s32.totalorder %s115, %s117
      %p124 = scmp.eq.s32.totalorder %s23, 1
      %p125 = por %p123, %p124
      %p126 = scmp.ne.s32.totalorder %s117, %s118
      %p127 = scmp.eq.s32.totalorder %s23, 0
      %p128 = por %p126, %p127
      %p129 = scmp.ne.s32.totalorder %s117, %s118
      %p130 = scmp.eq.s32.totalorder %s24, 1
      %p131 = por %p129, %p130
      %p133 = scmp.ne.s32.totalorder %s118, %s132
      %p134 = scmp.eq.s32.totalorder %s24, 0
      %p135 = por %p133, %p134
      %s137 = sadd.s32 %s136, 1
      %p140 = scmp.eq.s32.totalorder %s18, 1
      %p141 = scmp.ne.s32.totalorder %s136, %s138
      %p142 = scmp.eq.s32.totalorder %s18, 0
      %p143 = por %p141, %p142
      %p144 = scmp.ne.s32.totalorder %s136, %s138
      %p145 = scmp.eq.s32.totalorder %s23, 1
      %p146 = por %p144, %p145
      %p147 = scmp.ne.s32.totalorder %s138, %s139
      %p148 = scmp.eq.s32.totalorder %s23, 0
      %p149 = por %p147, %p148
      %p150 = scmp.ne.s32.totalorder %s138, %s139
      %p151 = scmp.eq.s32.totalorder %s24, 1
      %p152 = por %p150, %p151
      %p154 = scmp.ne.s32.totalorder %s139, %s153
      %p155 = scmp.eq.s32.totalorder %s24, 0
      %p156 = por %p154, %p155
      %s158 = sadd.s32 %s157, 1
      %p161 = scmp.eq.s32.totalorder %s18, 1
      %p162 = scmp.ne.s32.totalorder %s157, %s159
      %p163 = scmp.eq.s32.totalorder %s18, 0
      %p164 = por %p162, %p163
      %p165 = scmp.ne.s32.totalorder %s157, %s159
      %p166 = scmp.eq.s32.totalorder %s23, 1
      %p167 = por %p165, %p166
      %p168 = scmp.ne.s32.totalorder %s159, %s160
      %p169 = scmp.eq.s32.totalorder %s23, 0
      %p170 = por %p168, %p169
      %p171 = scmp.ne.s32.totalorder %s159, %s160
      %p172 = scmp.eq.s32.totalorder %s24, 1
      %p173 = por %p171, %p172
      %p175 = scmp.ne.s32.totalorder %s160, %s174
      %p176 = scmp.eq.s32.totalorder %s24, 0
      %p177 = por %p175, %p176
      %s178 = ssub.s32 %s18, %s25
      %p179 = scmp.eq.s32.totalorder %s178, 0
      %s181 = sadd.s32 %s180, 1
      %s182 = scalar_select %p179, %s180, %s181
      %p185 = pneg %p179
      %p186 = scmp.eq.s32.totalorder %s18, 1
      %p187 = por %p185, %p186
      %p188 = scmp.ne.s32.totalorder %s180, %s183
      %p189 = scmp.eq.s32.totalorder %s18, 0
      %p190 = por %p188, %p189
      %p191 = scmp.ne.s32.totalorder %s180, %s183
      %p192 = scmp.eq.s32.totalorder %s23, 1
      %p193 = por %p191, %p192
      %p194 = scmp.ne.s32.totalorder %s183, %s184
      %p195 = scmp.eq.s32.totalorder %s23, 0
      %p196 = por %p194, %p195
      %p197 = scmp.ne.s32.totalorder %s183, %s184
      %p198 = scmp.eq.s32.totalorder %s24, 1
      %p199 = por %p197, %p198
      %p201 = scmp.ne.s32.totalorder %s184, %s200
      %p202 = scmp.eq.s32.totalorder %s24, 0
      %p203 = por %p201, %p202
      %p204 = scmp.le.s32.totalorder 1, %s18
      %p205 = scmp.lt.s32.totalorder %s18, 3
      %p206 = pnand %p204, %p205
      %p207 = pneg %p206
      // Predicated region
      $region9: #{tpu_custom_call.1} parent=5 // pred_check
        _
      $region10: #{tpu_custom_call.1} parent=5 // pred_check_branch
        %209 = sbr.rel (%p206) target = $region12
      $region11: #{tpu_custom_call.1} parent=5 // pred_region
        %s210 = ssub.s32 %s18, 1
        // Predicated region
        $region13: #{tpu_custom_call.1} parent=11 // pred_check
          %p211 = pneg %p65
        $region14: #{tpu_custom_call.1} parent=11 // pred_check_branch
          %213 = sbr.rel (%p211) target = $region16
        $region15: #{tpu_custom_call.1} parent=11 // pred_region
          _
        $region16: #{tpu_custom_call.1} parent=11 // pred_fallthru
          _
        // Predicated region
        $region17: #{tpu_custom_call.1} parent=11 // pred_check
          %p214 = pneg %p86
        $region18: #{tpu_custom_call.1} parent=11 // pred_check_branch
          %216 = sbr.rel (%p214) target = $region20
        $region19: #{tpu_custom_call.1} parent=11 // pred_region
          _
        $region20: #{tpu_custom_call.1} parent=11 // pred_fallthru
          _
        // Predicated region
        $region21: #{tpu_custom_call.1} parent=11 // pred_check
          %p217 = pneg %p107
        $region22: #{tpu_custom_call.1} parent=11 // pred_check_branch
          %219 = sbr.rel (%p217) target = $region24
        $region23: #{tpu_custom_call.1} parent=11 // pred_region
          _
        $region24: #{tpu_custom_call.1} parent=11 // pred_fallthru
          _
        // Predicated region
        $region25: #{tpu_custom_call.1} parent=11 // pred_check
          %p220 = pneg %p128
        $region26: #{tpu_custom_call.1} parent=11 // pred_check_branch
          %222 = sbr.rel (%p220) target = $region28
        $region27: #{tpu_custom_call.1} parent=11 // pred_region
          _
        $region28: #{tpu_custom_call.1} parent=11 // pred_fallthru
          _
        // Predicated region
        $region29: #{tpu_custom_call.1} parent=11 // pred_check
          %p223 = pneg %p149
        $region30: #{tpu_custom_call.1} parent=11 // pred_check_branch
          %225 = sbr.rel (%p223) target = $region32
        $region31: #{tpu_custom_call.1} parent=11 // pred_region
          _
        $region32: #{tpu_custom_call.1} parent=11 // pred_fallthru
          _
        // Predicated region
        $region33: #{tpu_custom_call.1} parent=11 // pred_check
          %p226 = pneg %p170
        $region34: #{tpu_custom_call.1} parent=11 // pred_check_branch
          %228 = sbr.rel (%p226) target = $region36
        $region35: #{tpu_custom_call.1} parent=11 // pred_region
          _
        $region36: #{tpu_custom_call.1} parent=11 // pred_fallthru
          _
      $region12: #{tpu_custom_call.1} parent=5 // pred_fallthru
        _
      %p229 = scmp.lt.s32.totalorder %s18, 2
      // Predicated region
      $region37: #{tpu_custom_call.1} parent=5 // pred_check
        %p230 = pneg %p229
      $region38: #{tpu_custom_call.1} parent=5 // pred_check_branch
        %232 = sbr.rel (%p230) target = $region40
      $region39: #{tpu_custom_call.1} parent=5 // pred_region
        // Predicated region
        $region41: #{tpu_custom_call.1} parent=39 // pred_check
          %p233 = pneg %p38
        $region42: #{tpu_custom_call.1} parent=39 // pred_check_branch
          %235 = sbr.rel (%p233) target = $region44
        $region43: #{tpu_custom_call.1} parent=39 // pred_region
          %s236 = smul.u32 16, %s18
          %p237 = scmp.lt.s32.totalorder %s236, 31
          %s238 = scalar_select %p237, %s236, 31
          %s239 = smul.addr %s238, 8
          %s240 = scalar_lea.vmem %s0, %s239
          %s241 = smul.u32 16, %s18
        $region44: #{tpu_custom_call.1} parent=39 // pred_fallthru
          _
      $region40: #{tpu_custom_call.1} parent=5 // pred_fallthru
        _
      %p242 = scmp.le.s32.totalorder 1, %s18
      %p243 = scmp.lt.s32.totalorder %s18, 3
      %p244 = pnand %p242, %p243
      %p245 = pneg %p244
      // Predicated region
      $region45: #{tpu_custom_call.1} parent=5 // pred_check
        _
      $region46: #{tpu_custom_call.1} parent=5 // pred_check_branch
        %247 = sbr.rel (%p244) target = $region48
      $region47: #{tpu_custom_call.1} parent=5 // pred_region
        %s248 = ssub.s32 %s18, 1
        %s249 = smul.u32 16, %s23
        %p250 = scmp.lt.s32.totalorder %s249, 31
        %s251 = scalar_select %p250, %s249, 31
        %s252 = smul.addr %s251, 8
        %s253 = scalar_lea.vmem %s0, %s252
        %p254 = pneg %p44
        %p255 = pneg %p41
        %p256 = pneg %p65
        %p257 = pneg %p62
        %p258 = pneg %p86
        %p259 = pneg %p83
        %p260 = pneg %p107
        %p261 = pneg %p104
        %p262 = pneg %p128
        %p263 = pneg %p125
        %p264 = pneg %p149
        %p265 = pneg %p146
        %p266 = pneg %p170
        %p267 = pneg %p167
        %p268 = pneg %p196
        %p269 = pneg %p193
        %s270 = sand.u32 %s183, 1
        %s271 = scalar_lea.sflag [#allocation4], %s270
        %s272 = sand.u32 %s183, 1
        %s273 = scalar_lea.vmem [#allocation3], %s272
        %s274 = smul.u32 16, %s23
        %p275 = scmp.lt.s32.totalorder %s274, 31
        %s276 = scalar_select %p275, %s274, 31
        %s277 = smul.addr %s276, 8
        %s278 = scalar_lea.vmem %s0, %s277
        %s279 = smul.u32 16, %s23
        %v280 = vld [vmem:[%s278] sm:$0xff]
        %v281 = vld [vmem:[%s278 + $0x8] sm:$0xff]
        %v282 = vld [vmem:[%s278 + $0x10] sm:$0xff]
        %v283 = vld [vmem:[%s278 + $0x18] sm:$0xff]
        %v284 = vld [vmem:[%s278 + $0x20] sm:$0xff]
        %v285 = vld [vmem:[%s278 + $0x28] sm:$0xff]
        %v286 = vld [vmem:[%s278 + $0x30] sm:$0xff]
        %v287 = vld [vmem:[%s278 + $0x38] sm:$0xff]
        %v288 = vld [vmem:[%s278 + $0x40] sm:$0xff]
        %v289 = vld [vmem:[%s278 + $0x48] sm:$0xff]
        %v290 = vld [vmem:[%s278 + $0x50] sm:$0xff]
        %v291 = vld [vmem:[%s278 + $0x58] sm:$0xff]
        %v292 = vld [vmem:[%s278 + $0x60] sm:$0xff]
        %v293 = vld [vmem:[%s278 + $0x68] sm:$0xff]
        %v294 = vld [vmem:[%s278 + $0x70] sm:$0xff]
        %v295 = vld [vmem:[%s278 + $0x78] sm:$0xff]
        %v296 = vld [vmem:[%s1] sm:$0xff]
        %v297 = vld [vmem:[%s1 + $0x8] sm:$0xff]
        %v298 = vld [vmem:[%s1 + $0x10] sm:$0xff]
        %v299 = vld [vmem:[%s1 + $0x18] sm:$0xff]
        %v300 = vld [vmem:[%s2] sm:$0xff]
        %v301 = vld [vmem:[%s2 + $0x8] sm:$0xff]
        %v302 = vld [vmem:[%s2 + $0x10] sm:$0xff]
        %v303 = vld [vmem:[%s2 + $0x18] sm:$0xff]
        %305 = vset.pattern.permute.xlu0 0
        %306 = vperm.xlu0 %305, %v300
        %v307 = vpop.permute.xlu0 %306
        %310 = vset.pattern.permute.xlu0 0
        %311 = vperm.xlu0 %310, %v301
        %v312 = vpop.permute.xlu0 %311
        %315 = vset.pattern.permute.xlu0 0
        %316 = vperm.xlu0 %315, %v302
        %v317 = vpop.permute.xlu0 %316
        %320 = vset.pattern.permute.xlu0 0
        %321 = vperm.xlu0 %320, %v303
        %v322 = vpop.permute.xlu0 %321
        %vm324 = vcmask 130048
        %v326 = vsel %vm324, %v296, 0
        %v329 = vsel %vm324, %v297, 0
        %v332 = vsel %vm324, %v298, 0
        %v335 = vsel %vm324, %v299, 0
        %v338 = vsel %vm324, %v280, 0
        %v341 = vsel %vm324, %v281, 0
        %v344 = vsel %vm324, %v282, 0
        %v347 = vsel %vm324, %v283, 0
        %v350 = vsel %vm324, %v284, 0
        %v353 = vsel %vm324, %v285, 0
        %v356 = vsel %vm324, %v286, 0
        %v359 = vsel %vm324, %v287, 0
        %v362 = vsel %vm324, %v288, 0
        %v365 = vsel %vm324, %v289, 0
        %v368 = vsel %vm324, %v290, 0
        %v371 = vsel %vm324, %v291, 0
        %v374 = vsel %vm324, %v292, 0
        %v377 = vsel %vm324, %v293, 0
        %v380 = vsel %vm324, %v294, 0
        %v383 = vsel %vm324, %v295, 0
        %385 = vmatprep.subr.mxu0 0.0
        %v386 = vand.u32 %v338, 4294901760
        %387 = vmatpush1.xpose.msra.mxu0 %v386
        %388 = vmatprep.subr.mxu0 0.0
        %v389 = vand.u32 %v341, 4294901760
        %390 = vmatpush1.xpose.msra.mxu0 %v389
        %391 = vmatprep.subr.mxu0 0.0
        %v392 = vand.u32 %v344, 4294901760
        %393 = vmatpush1.xpose.msra.mxu0 %v392
        %394 = vmatprep.subr.mxu0 0.0
        %v395 = vand.u32 %v347, 4294901760
        %396 = vmatpush1.xpose.msra.mxu0 %v395
        %397 = vmatprep.subr.mxu0 0.0
        %v398 = vand.u32 %v350, 4294901760
        %399 = vmatpush1.xpose.msra.mxu0 %v398
        %400 = vmatprep.subr.mxu0 0.0
        %v401 = vand.u32 %v353, 4294901760
        %402 = vmatpush1.xpose.msra.mxu0 %v401
        %403 = vmatprep.subr.mxu0 0.0
        %v404 = vand.u32 %v356, 4294901760
        %405 = vmatpush1.xpose.msra.mxu0 %v404
        %406 = vmatprep.subr.mxu0 0.0
        %v407 = vand.u32 %v359, 4294901760
        %408 = vmatpush1.xpose.msra.mxu0 %v407
        %409 = vmatprep.subr.mxu0 0.0
        %v410 = vand.u32 %v362, 4294901760
        %411 = vmatpush1.xpose.msra.mxu0 %v410
        %412 = vmatprep.subr.mxu0 0.0
        %v413 = vand.u32 %v365, 4294901760
        %414 = vmatpush1.xpose.msra.mxu0 %v413
        %415 = vmatprep.subr.mxu0 0.0
        %v416 = vand.u32 %v368, 4294901760
        %417 = vmatpush1.xpose.msra.mxu0 %v416
        %418 = vmatprep.subr.mxu0 0.0
        %v419 = vand.u32 %v371, 4294901760
        %420 = vmatpush1.xpose.msra.mxu0 %v419
        %421 = vmatprep.subr.mxu0 0.0
        %v422 = vand.u32 %v374, 4294901760
        %423 = vmatpush1.xpose.msra.mxu0 %v422
        %424 = vmatprep.subr.mxu0 0.0
        %v425 = vand.u32 %v377, 4294901760
        %426 = vmatpush1.xpose.msra.mxu0 %v425
        %427 = vmatprep.subr.mxu0 0.0
        %v428 = vand.u32 %v380, 4294901760
        %429 = vmatpush1.xpose.msra.mxu0 %v428
        %430 = vmatprep.subr.mxu0 0.0
        %v431 = vand.u32 %v383, 4294901760
        %432 = vmatpush1.xpose.msra.mxu0 %v431
        %433 = vmatprep.subr.mxu0 0.0
        %434 = vmatpush1.xpose.msra.mxu0 0.0
        %435 = vmatprep.subr.mxu0 0.0
        %436 = vmatpush1.xpose.msra.mxu0 0.0
        %437 = vmatprep.subr.mxu0 0.0
        %438 = vmatpush1.xpose.msra.mxu0 0.0
        %439 = vmatprep.subr.mxu0 0.0
        %440 = vmatpush1.xpose.msra.mxu0 0.0
        %441 = vmatprep.subr.mxu0 0.0
        %442 = vmatpush1.xpose.msra.mxu0 0.0
        %443 = vmatprep.subr.mxu0 0.0
        %444 = vmatpush1.xpose.msra.mxu0 0.0
        %445 = vmatprep.subr.mxu0 0.0
        %446 = vmatpush1.xpose.msra.mxu0 0.0
        %447 = vmatprep.subr.mxu0 0.0
        %448 = vmatpush1.xpose.msra.mxu0 0.0
        %449 = vmatprep.subr.mxu0 0.0
        %450 = vmatpush1.xpose.msra.mxu0 0.0
        %451 = vmatprep.subr.mxu0 0.0
        %452 = vmatpush1.xpose.msra.mxu0 0.0
        %453 = vmatprep.subr.mxu0 0.0
        %454 = vmatpush1.xpose.msra.mxu0 0.0
        %455 = vmatprep.subr.mxu0 0.0
        %456 = vmatpush1.xpose.msra.mxu0 0.0
        %457 = vmatprep.subr.mxu0 0.0
        %458 = vmatpush1.xpose.msra.mxu0 0.0
        %459 = vmatprep.subr.mxu0 0.0
        %460 = vmatpush1.xpose.msra.mxu0 0.0
        %461 = vmatprep.subr.mxu0 0.0
        %462 = vmatpush1.xpose.msra.mxu0 0.0
        %463 = vmatprep.subr.mxu0 0.0
        %464 = vmatpush1.xpose.msra.mxu0 0.0
        %465 = vmatprep.mubr.f32.mxu0 0.0
        %v466 = vand.u32 %v326, 4294901760
        %v467 = vsub.f32 %v326, %v466
        %v468 = vand.u32 %v467, 4294901760
        %v469 = vsub.f32 %v467, %v468
        %v470 = vand.u32 %v469, 4294901760
        %471 = vmatmul.mubr.f32.gmra.mrb[0].mxu0 %v470
        %v472 = vpop.f32.mrb[0].mxu0
        %v473 = vadd.f32 %v307, %v472
        %v474 = vpop.f32.mrb[0].mxu0
        %475 = vmatprep.mubr.f32.mxu0 0.0
        %v476 = vand.u32 %v329, 4294901760
        %v477 = vsub.f32 %v329, %v476
        %v478 = vand.u32 %v477, 4294901760
        %v479 = vsub.f32 %v477, %v478
        %v480 = vand.u32 %v479, 4294901760
        %481 = vmatmul.mubr.f32.gmra.mrb[0].mxu0 %v480
        %v482 = vpop.f32.mrb[0].mxu0
        %v483 = vadd.f32 %v312, %v482
        %v484 = vpop.f32.mrb[0].mxu0
        %485 = vmatprep.mubr.f32.mxu0 0.0
        %v486 = vand.u32 %v332, 4294901760
        %v487 = vsub.f32 %v332, %v486
        %v488 = vand.u32 %v487, 4294901760
        %v489 = vsub.f32 %v487, %v488
        %v490 = vand.u32 %v489, 4294901760
        %491 = vmatmul.mubr.f32.gmra.mrb[0].mxu0 %v490
        %v492 = vpop.f32.mrb[0].mxu0
        %v493 = vadd.f32 %v317, %v492
        %v494 = vpop.f32.mrb[0].mxu0
        %495 = vmatprep.mubr.f32.mxu0 0.0
        %v496 = vand.u32 %v335, 4294901760
        %v497 = vsub.f32 %v335, %v496
        %v498 = vand.u32 %v497, 4294901760
        %v499 = vsub.f32 %v497, %v498
        %v500 = vand.u32 %v499, 4294901760
        %501 = vmatmul.mubr.f32.gmra.mrb[0].mxu0 %v500
        %v502 = vpop.f32.mrb[0].mxu0
        %v503 = vadd.f32 %v322, %v502
        %v504 = vpop.f32.mrb[0].mxu0
        %505 = vdwg.mxu0
        %506 = vmatprep.subr.mxu0 0.0
        %v507 = vand.u32 %v338, 4294901760
        %v508 = vsub.f32 %v338, %v507
        %v509 = vand.u32 %v508, 4294901760
        %v510 = vsub.f32 %v508, %v509
        %v511 = vand.u32 %v510, 4294901760
        %512 = vmatpush1.xpose.msra.mxu0 %v511
        %513 = vmatprep.subr.mxu0 0.0
        %v514 = vand.u32 %v341, 4294901760
        %v515 = vsub.f32 %v341, %v514
        %v516 = vand.u32 %v515, 4294901760
        %v517 = vsub.f32 %v515, %v516
        %v518 = vand.u32 %v517, 4294901760
        %519 = vmatpush1.xpose.msra.mxu0 %v518
        %520 = vmatprep.subr.mxu0 0.0
        %v521 = vand.u32 %v344, 4294901760
        %v522 = vsub.f32 %v344, %v521
        %v523 = vand.u32 %v522, 4294901760
        %v524 = vsub.f32 %v522, %v523
        %v525 = vand.u32 %v524, 4294901760
        %526 = vmatpush1.xpose.msra.mxu0 %v525
        %527 = vmatprep.subr.mxu0 0.0
        %v528 = vand.u32 %v347, 4294901760
        %v529 = vsub.f32 %v347, %v528
        %v530 = vand.u32 %v529, 4294901760
        %v531 = vsub.f32 %v529, %v530
        %v532 = vand.u32 %v531, 4294901760
        %533 = vmatpush1.xpose.msra.mxu0 %v532
        %534 = vmatprep.subr.mxu0 0.0
        %v535 = vand.u32 %v350, 4294901760
        %v536 = vsub.f32 %v350, %v535
        %v537 = vand.u32 %v536, 4294901760
        %v538 = vsub.f32 %v536, %v537
        %v539 = vand.u32 %v538, 4294901760
        %540 = vmatpush1.xpose.msra.mxu0 %v539
        %541 = vmatprep.subr.mxu0 0.0
        %v542 = vand.u32 %v353, 4294901760
        %v543 = vsub.f32 %v353, %v542
        %v544 = vand.u32 %v543, 4294901760
        %v545 = vsub.f32 %v543, %v544
        %v546 = vand.u32 %v545, 4294901760
        %547 = vmatpush1.xpose.msra.mxu0 %v546
        %548 = vmatprep.subr.mxu0 0.0
        %v549 = vand.u32 %v356, 4294901760
        %v550 = vsub.f32 %v356, %v549
        %v551 = vand.u32 %v550, 4294901760
        %v552 = vsub.f32 %v550, %v551
        %v553 = vand.u32 %v552, 4294901760
        %554 = vmatpush1.xpose.msra.mxu0 %v553
        %555 = vmatprep.subr.mxu0 0.0
        %v556 = vand.u32 %v359, 4294901760
        %v557 = vsub.f32 %v359, %v556
        %v558 = vand.u32 %v557, 4294901760
        %v559 = vsub.f32 %v557, %v558
        %v560 = vand.u32 %v559, 4294901760
        %561 = vmatpush1.xpose.msra.mxu0 %v560
        %562 = vmatprep.subr.mxu0 0.0
        %v563 = vand.u32 %v362, 4294901760
        %v564 = vsub.f32 %v362, %v563
        %v565 = vand.u32 %v564, 4294901760
        %v566 = vsub.f32 %v564, %v565
        %v567 = vand.u32 %v566, 4294901760
        %568 = vmatpush1.xpose.msra.mxu0 %v567
        %569 = vmatprep.subr.mxu0 0.0
        %v570 = vand.u32 %v365, 4294901760
        %v571 = vsub.f32 %v365, %v570
        %v572 = vand.u32 %v571, 4294901760
        %v573 = vsub.f32 %v571, %v572
        %v574 = vand.u32 %v573, 4294901760
        %575 = vmatpush1.xpose.msra.mxu0 %v574
        %576 = vmatprep.subr.mxu0 0.0
        %v577 = vand.u32 %v368, 4294901760
        %v578 = vsub.f32 %v368, %v577
        %v579 = vand.u32 %v578, 4294901760
        %v580 = vsub.f32 %v578, %v579
        %v581 = vand.u32 %v580, 4294901760
        %582 = vmatpush1.xpose.msra.mxu0 %v581
        %583 = vmatprep.subr.mxu0 0.0
        %v584 = vand.u32 %v371, 4294901760
        %v585 = vsub.f32 %v371, %v584
        %v586 = vand.u32 %v585, 4294901760
        %v587 = vsub.f32 %v585, %v586
        %v588 = vand.u32 %v587, 4294901760
        %589 = vmatpush1.xpose.msra.mxu0 %v588
        %590 = vmatprep.subr.mxu0 0.0
        %v591 = vand.u32 %v374, 4294901760
        %v592 = vsub.f32 %v374, %v591
        %v593 = vand.u32 %v592, 4294901760
        %v594 = vsub.f32 %v592, %v593
        %v595 = vand.u32 %v594, 4294901760
        %596 = vmatpush1.xpose.msra.mxu0 %v595
        %597 = vmatprep.subr.mxu0 0.0
        %v598 = vand.u32 %v377, 4294901760
        %v599 = vsub.f32 %v377, %v598
        %v600 = vand.u32 %v599, 4294901760
        %v601 = vsub.f32 %v599, %v600
        %v602 = vand.u32 %v601, 4294901760
        %603 = vmatpush1.xpose.msra.mxu0 %v602
        %604 = vmatprep.subr.mxu0 0.0
        %v605 = vand.u32 %v380, 4294901760
        %v606 = vsub.f32 %v380, %v605
        %v607 = vand.u32 %v606, 4294901760
        %v608 = vsub.f32 %v606, %v607
        %v609 = vand.u32 %v608, 4294901760
        %610 = vmatpush1.xpose.msra.mxu0 %v609
        %611 = vmatprep.subr.mxu0 0.0
        %v612 = vand.u32 %v383, 4294901760
        %v613 = vsub.f32 %v383, %v612
        %v614 = vand.u32 %v613, 4294901760
        %v615 = vsub.f32 %v613, %v614
        %v616 = vand.u32 %v615, 4294901760
        %617 = vmatpush1.xpose.msra.mxu0 %v616
        %618 = vmatprep.subr.mxu0 0.0
        %619 = vmatpush1.xpose.msra.mxu0 0.0
        %620 = vmatprep.subr.mxu0 0.0
        %621 = vmatpush1.xpose.msra.mxu0 0.0
        %622 = vmatprep.subr.mxu0 0.0
        %623 = vmatpush1.xpose.msra.mxu0 0.0
        %624 = vmatprep.subr.mxu0 0.0
        %625 = vmatpush1.xpose.msra.mxu0 0.0
        %626 = vmatprep.subr.mxu0 0.0
        %627 = vmatpush1.xpose.msra.mxu0 0.0
        %628 = vmatprep.subr.mxu0 0.0
        %629 = vmatpush1.xpose.msra.mxu0 0.0
        %630 = vmatprep.subr.mxu0 0.0
        %631 = vmatpush1.xpose.msra.mxu0 0.0
        %632 = vmatprep.subr.mxu0 0.0
        %633 = vmatpush1.xpose.msra.mxu0 0.0
        %634 = vmatprep.subr.mxu0 0.0
        %635 = vmatpush1.xpose.msra.mxu0 0.0
        %636 = vmatprep.subr.mxu0 0.0
        %637 = vmatpush1.xpose.msra.mxu0 0.0
        %638 = vmatprep.subr.mxu0 0.0
        %639 = vmatpush1.xpose.msra.mxu0 0.0
        %640 = vmatprep.subr.mxu0 0.0
        %641 = vmatpush1.xpose.msra.mxu0 0.0
        %642 = vmatprep.subr.mxu0 0.0
        %643 = vmatpush1.xpose.msra.mxu0 0.0
        %644 = vmatprep.subr.mxu0 0.0
        %645 = vmatpush1.xpose.msra.mxu0 0.0
        %646 = vmatprep.subr.mxu0 0.0
        %647 = vmatpush1.xpose.msra.mxu0 0.0
        %648 = vmatprep.subr.mxu0 0.0
        %649 = vmatpush1.xpose.msra.mxu0 0.0
        %650 = vmatprep.mubr.f32.mxu0 0.0
        %v651 = vand.u32 %v326, 4294901760
        %652 = vmatmul.mubr.f32.gmra.mrb[0].mxu0 %v651
        %v653 = vpop.f32.mrb[0].mxu0
        %v654 = vadd.f32 %v473, %v653
        %v655 = vpop.f32.mrb[0].mxu0
        %656 = vmatprep.mubr.f32.mxu0 0.0
        %v657 = vand.u32 %v329, 4294901760
        %658 = vmatmul.mubr.f32.gmra.mrb[0].mxu0 %v657
        %v659 = vpop.f32.mrb[0].mxu0
        %v660 = vadd.f32 %v483, %v659
        %v661 = vpop.f32.mrb[0].mxu0
        %662 = vmatprep.mubr.f32.mxu0 0.0
        %v663 = vand.u32 %v332, 4294901760
        %664 = vmatmul.mubr.f32.gmra.mrb[0].mxu0 %v663
        %v665 = vpop.f32.mrb[0].mxu0
        %v666 = vadd.f32 %v493, %v665
        %v667 = vpop.f32.mrb[0].mxu0
        %668 = vmatprep.mubr.f32.mxu0 0.0
        %v669 = vand.u32 %v335, 4294901760
        %670 = vmatmul.mubr.f32.gmra.mrb[0].mxu0 %v669
        %v671 = vpop.f32.mrb[0].mxu0
        %v672 = vadd.f32 %v503, %v671
        %v673 = vpop.f32.mrb[0].mxu0
        %674 = vdwg.mxu0
        %675 = vmatprep.subr.mxu0 0.0
        %v676 = vand.u32 %v338, 4294901760
        %v677 = vsub.f32 %v338, %v676
        %678 = vmatpush1.xpose.msra.mxu0 %v677
        %679 = vmatprep.subr.mxu0 0.0
        %v680 = vand.u32 %v341, 4294901760
        %v681 = vsub.f32 %v341, %v680
        %682 = vmatpush1.xpose.msra.mxu0 %v681
        %683 = vmatprep.subr.mxu0 0.0
        %v684 = vand.u32 %v344, 4294901760
        %v685 = vsub.f32 %v344, %v684
        %686 = vmatpush1.xpose.msra.mxu0 %v685
        %687 = vmatprep.subr.mxu0 0.0
        %v688 = vand.u32 %v347, 4294901760
        %v689 = vsub.f32 %v347, %v688
        %690 = vmatpush1.xpose.msra.mxu0 %v689
        %691 = vmatprep.subr.mxu0 0.0
        %v692 = vand.u32 %v350, 4294901760
        %v693 = vsub.f32 %v350, %v692
        %694 = vmatpush1.xpose.msra.mxu0 %v693
        %695 = vmatprep.subr.mxu0 0.0
        %v696 = vand.u32 %v353, 4294901760
        %v697 = vsub.f32 %v353, %v696
        %698 = vmatpush1.xpose.msra.mxu0 %v697
        %699 = vmatprep.subr.mxu0 0.0
        %v700 = vand.u32 %v356, 4294901760
        %v701 = vsub.f32 %v356, %v700
        %702 = vmatpush1.xpose.msra.mxu0 %v701
        %703 = vmatprep.subr.mxu0 0.0
        %v704 = vand.u32 %v359, 4294901760
        %v705 = vsub.f32 %v359, %v704
        %706 = vmatpush1.xpose.msra.mxu0 %v705
        %707 = vmatprep.subr.mxu0 0.0
        %v708 = vand.u32 %v362, 4294901760
        %v709 = vsub.f32 %v362, %v708
        %710 = vmatpush1.xpose.msra.mxu0 %v709
        %711 = vmatprep.subr.mxu0 0.0
        %v712 = vand.u32 %v365, 4294901760
        %v713 = vsub.f32 %v365, %v712
        %714 = vmatpush1.xpose.msra.mxu0 %v713
        %715 = vmatprep.subr.mxu0 0.0
        %v716 = vand.u32 %v368, 4294901760
        %v717 = vsub.f32 %v368, %v716
        %718 = vmatpush1.xpose.msra.mxu0 %v717
        %719 = vmatprep.subr.mxu0 0.0
        %v720 = vand.u32 %v371, 4294901760
        %v721 = vsub.f32 %v371, %v720
        %722 = vmatpush1.xpose.msra.mxu0 %v721
        %723 = vmatprep.subr.mxu0 0.0
        %v724 = vand.u32 %v374, 4294901760
        %v725 = vsub.f32 %v374, %v724
        %726 = vmatpush1.xpose.msra.mxu0 %v725
        %727 = vmatprep.subr.mxu0 0.0
        %v728 = vand.u32 %v377, 4294901760
        %v729 = vsub.f32 %v377, %v728
        %730 = vmatpush1.xpose.msra.mxu0 %v729
        %731 = vmatprep.subr.mxu0 0.0
        %v732 = vand.u32 %v380, 4294901760
        %v733 = vsub.f32 %v380, %v732
        %734 = vmatpush1.xpose.msra.mxu0 %v733
        %735 = vmatprep.subr.mxu0 0.0
        %v736 = vand.u32 %v383, 4294901760
        %v737 = vsub.f32 %v383, %v736
        %738 = vmatpush1.xpose.msra.mxu0 %v737
        %739 = vmatprep.subr.mxu0 0.0
        %740 = vmatpush1.xpose.msra.mxu0 0.0
        %741 = vmatprep.subr.mxu0 0.0
        %742 = vmatpush1.xpose.msra.mxu0 0.0
        %743 = vmatprep.subr.mxu0 0.0
        %744 = vmatpush1.xpose.msra.mxu0 0.0
        %745 = vmatprep.subr.mxu0 0.0
        %746 = vmatpush1.xpose.msra.mxu0 0.0
        %747 = vmatprep.subr.mxu0 0.0
        %748 = vmatpush1.xpose.msra.mxu0 0.0
        %749 = vmatprep.subr.mxu0 0.0
        %750 = vmatpush1.xpose.msra.mxu0 0.0
        %751 = vmatprep.subr.mxu0 0.0
        %752 = vmatpush1.xpose.msra.mxu0 0.0
        %753 = vmatprep.subr.mxu0 0.0
        %754 = vmatpush1.xpose.msra.mxu0 0.0
        %755 = vmatprep.subr.mxu0 0.0
        %756 = vmatpush1.xpose.msra.mxu0 0.0
        %757 = vmatprep.subr.mxu0 0.0
        %758 = vmatpush1.xpose.msra.mxu0 0.0
        %759 = vmatprep.subr.mxu0 0.0
        %760 = vmatpush1.xpose.msra.mxu0 0.0
        %761 = vmatprep.subr.mxu0 0.0
        %762 = vmatpush1.xpose.msra.mxu0 0.0
        %763 = vmatprep.subr.mxu0 0.0
        %764 = vmatpush1.xpose.msra.mxu0 0.0
        %765 = vmatprep.subr.mxu0 0.0
        %766 = vmatpush1.xpose.msra.mxu0 0.0
        %767 = vmatprep.subr.mxu0 0.0
        %768 = vmatpush1.xpose.msra.mxu0 0.0
        %769 = vmatprep.subr.mxu0 0.0
        %770 = vmatpush1.xpose.msra.mxu0 0.0
        %771 = vmatprep.mubr.f32.mxu0 0.0
        %v772 = vand.u32 %v326, 4294901760
        %v773 = vsub.f32 %v326, %v772
        %774 = vmatmul.mubr.f32.gmra.mrb[0].mxu0 %v773
        %v775 = vpop.f32.mrb[0].mxu0
        %v776 = vadd.f32 %v654, %v775
        %v777 = vpop.f32.mrb[0].mxu0
        %778 = vmatprep.mubr.f32.mxu0 0.0
        %v779 = vand.u32 %v329, 4294901760
        %v780 = vsub.f32 %v329, %v779
        %781 = vmatmul.mubr.f32.gmra.mrb[0].mxu0 %v780
        %v782 = vpop.f32.mrb[0].mxu0
        %v783 = vadd.f32 %v660, %v782
        %v784 = vpop.f32.mrb[0].mxu0
        %785 = vmatprep.mubr.f32.mxu0 0.0
        %v786 = vand.u32 %v332, 4294901760
        %v787 = vsub.f32 %v332, %v786
        %788 = vmatmul.mubr.f32.gmra.mrb[0].mxu0 %v787
        %v789 = vpop.f32.mrb[0].mxu0
        %v790 = vadd.f32 %v666, %v789
        %v791 = vpop.f32.mrb[0].mxu0
        %792 = vmatprep.mubr.f32.mxu0 0.0
        %v793 = vand.u32 %v335, 4294901760
        %v794 = vsub.f32 %v335, %v793
        %795 = vmatmul.mubr.f32.gmra.mrb[0].mxu0 %v794
        %v796 = vpop.f32.mrb[0].mxu0
        %v797 = vadd.f32 %v672, %v796
        %v798 = vpop.f32.mrb[0].mxu0
        %799 = vdwg.mxu0
        %800 = vmatprep.subr.mxu0 0.0
        %v801 = vand.u32 %v338, 4294901760
        %802 = vmatpush1.xpose.msra.mxu0 %v801
        %803 = vmatprep.subr.mxu0 0.0
        %v804 = vand.u32 %v341, 4294901760
        %805 = vmatpush1.xpose.msra.mxu0 %v804
        %806 = vmatprep.subr.mxu0 0.0
        %v807 = vand.u32 %v344, 4294901760
        %808 = vmatpush1.xpose.msra.mxu0 %v807
        %809 = vmatprep.subr.mxu0 0.0
        %v810 = vand.u32 %v347, 4294901760
        %811 = vmatpush1.xpose.msra.mxu0 %v810
        %812 = vmatprep.subr.mxu0 0.0
        %v813 = vand.u32 %v350, 4294901760
        %814 = vmatpush1.xpose.msra.mxu0 %v813
        %815 = vmatprep.subr.mxu0 0.0
        %v816 = vand.u32 %v353, 4294901760
        %817 = vmatpush1.xpose.msra.mxu0 %v816
        %818 = vmatprep.subr.mxu0 0.0
        %v819 = vand.u32 %v356, 4294901760
        %820 = vmatpush1.xpose.msra.mxu0 %v819
        %821 = vmatprep.subr.mxu0 0.0
        %v822 = vand.u32 %v359, 4294901760
        %823 = vmatpush1.xpose.msra.mxu0 %v822
        %824 = vmatprep.subr.mxu0 0.0
        %v825 = vand.u32 %v362, 4294901760
        %826 = vmatpush1.xpose.msra.mxu0 %v825
        %827 = vmatprep.subr.mxu0 0.0
        %v828 = vand.u32 %v365, 4294901760
        %829 = vmatpush1.xpose.msra.mxu0 %v828
        %830 = vmatprep.subr.mxu0 0.0
        %v831 = vand.u32 %v368, 4294901760
        %832 = vmatpush1.xpose.msra.mxu0 %v831
        %833 = vmatprep.subr.mxu0 0.0
        %v834 = vand.u32 %v371, 4294901760
        %835 = vmatpush1.xpose.msra.mxu0 %v834
        %836 = vmatprep.subr.mxu0 0.0
        %v837 = vand.u32 %v374, 4294901760
        %838 = vmatpush1.xpose.msra.mxu0 %v837
        %839 = vmatprep.subr.mxu0 0.0
        %v840 = vand.u32 %v377, 4294901760
        %841 = vmatpush1.xpose.msra.mxu0 %v840
        %842 = vmatprep.subr.mxu0 0.0
        %v843 = vand.u32 %v380, 4294901760
        %844 = vmatpush1.xpose.msra.mxu0 %v843
        %845 = vmatprep.subr.mxu0 0.0
        %v846 = vand.u32 %v383, 4294901760
        %847 = vmatpush1.xpose.msra.mxu0 %v846
        %848 = vmatprep.subr.mxu0 0.0
        %849 = vmatpush1.xpose.msra.mxu0 0.0
        %850 = vmatprep.subr.mxu0 0.0
        %851 = vmatpush1.xpose.msra.mxu0 0.0
        %852 = vmatprep.subr.mxu0 0.0
        %853 = vmatpush1.xpose.msra.mxu0 0.0
        %854 = vmatprep.subr.mxu0 0.0
        %855 = vmatpush1.xpose.msra.mxu0 0.0
        %856 = vmatprep.subr.mxu0 0.0
        %857 = vmatpush1.xpose.msra.mxu0 0.0
        %858 = vmatprep.subr.mxu0 0.0
        %859 = vmatpush1.xpose.msra.mxu0 0.0
        %860 = vmatprep.subr.mxu0 0.0
        %861 = vmatpush1.xpose.msra.mxu0 0.0
        %862 = vmatprep.subr.mxu0 0.0
        %863 = vmatpush1.xpose.msra.mxu0 0.0
        %864 = vmatprep.subr.mxu0 0.0
        %865 = vmatpush1.xpose.msra.mxu0 0.0
        %866 = vmatprep.subr.mxu0 0.0
        %867 = vmatpush1.xpose.msra.mxu0 0.0
        %868 = vmatprep.subr.mxu0 0.0
        %869 = vmatpush1.xpose.msra.mxu0 0.0
        %870 = vmatprep.subr.mxu0 0.0
        %871 = vmatpush1.xpose.msra.mxu0 0.0
        %872 = vmatprep.subr.mxu0 0.0
        %873 = vmatpush1.xpose.msra.mxu0 0.0
        %874 = vmatprep.subr.mxu0 0.0
        %875 = vmatpush1.xpose.msra.mxu0 0.0
        %876 = vmatprep.subr.mxu0 0.0
        %877 = vmatpush1.xpose.msra.mxu0 0.0
        %878 = vmatprep.subr.mxu0 0.0
        %879 = vmatpush1.xpose.msra.mxu0 0.0
        %880 = vmatprep.mubr.f32.mxu0 0.0
        %v881 = vand.u32 %v326, 4294901760
        %v882 = vsub.f32 %v326, %v881
        %v883 = vand.u32 %v882, 4294901760
        %884 = vmatmul.mubr.f32.gmra.mrb[0].mxu0 %v883
        %v885 = vpop.f32.mrb[0].mxu0
        %v886 = vadd.f32 %v776, %v885
        %v887 = vpop.f32.mrb[0].mxu0
        %888 = vmatprep.mubr.f32.mxu0 0.0
        %v889 = vand.u32 %v329, 4294901760
        %v890 = vsub.f32 %v329, %v889
        %v891 = vand.u32 %v890, 4294901760
        %892 = vmatmul.mubr.f32.gmra.mrb[0].mxu0 %v891
        %v893 = vpop.f32.mrb[0].mxu0
        %v894 = vadd.f32 %v783, %v893
        %v895 = vpop.f32.mrb[0].mxu0
        %896 = vmatprep.mubr.f32.mxu0 0.0
        %v897 = vand.u32 %v332, 4294901760
        %v898 = vsub.f32 %v332, %v897
        %v899 = vand.u32 %v898, 4294901760
        %900 = vmatmul.mubr.f32.gmra.mrb[0].mxu0 %v899
        %v901 = vpop.f32.mrb[0].mxu0
        %v902 = vadd.f32 %v790, %v901
        %v903 = vpop.f32.mrb[0].mxu0
        %904 = vmatprep.mubr.f32.mxu0 0.0
        %v905 = vand.u32 %v335, 4294901760
        %v906 = vsub.f32 %v335, %v905
        %v907 = vand.u32 %v906, 4294901760
        %908 = vmatmul.mubr.f32.gmra.mrb[0].mxu0 %v907
        %v909 = vpop.f32.mrb[0].mxu0
        %v910 = vadd.f32 %v797, %v909
        %v911 = vpop.f32.mrb[0].mxu0
        %912 = vdwg.mxu0
        %913 = vmatprep.subr.mxu0 0.0
        %v914 = vand.u32 %v338, 4294901760
        %v915 = vsub.f32 %v338, %v914
        %v916 = vand.u32 %v915, 4294901760
        %917 = vmatpush1.xpose.msra.mxu0 %v916
        %918 = vmatprep.subr.mxu0 0.0
        %v919 = vand.u32 %v341, 4294901760
        %v920 = vsub.f32 %v341, %v919
        %v921 = vand.u32 %v920, 4294901760
        %922 = vmatpush1.xpose.msra.mxu0 %v921
        %923 = vmatprep.subr.mxu0 0.0
        %v924 = vand.u32 %v344, 4294901760
        %v925 = vsub.f32 %v344, %v924
        %v926 = vand.u32 %v925, 4294901760
        %927 = vmatpush1.xpose.msra.mxu0 %v926
        %928 = vmatprep.subr.mxu0 0.0
        %v929 = vand.u32 %v347, 4294901760
        %v930 = vsub.f32 %v347, %v929
        %v931 = vand.u32 %v930, 4294901760
        %932 = vmatpush1.xpose.msra.mxu0 %v931
        %933 = vmatprep.subr.mxu0 0.0
        %v934 = vand.u32 %v350, 4294901760
        %v935 = vsub.f32 %v350, %v934
        %v936 = vand.u32 %v935, 4294901760
        %937 = vmatpush1.xpose.msra.mxu0 %v936
        %938 = vmatprep.subr.mxu0 0.0
        %v939 = vand.u32 %v353, 4294901760
        %v940 = vsub.f32 %v353, %v939
        %v941 = vand.u32 %v940, 4294901760
        %942 = vmatpush1.xpose.msra.mxu0 %v941
        %943 = vmatprep.subr.mxu0 0.0
        %v944 = vand.u32 %v356, 4294901760
        %v945 = vsub.f32 %v356, %v944
        %v946 = vand.u32 %v945, 4294901760
        %947 = vmatpush1.xpose.msra.mxu0 %v946
        %948 = vmatprep.subr.mxu0 0.0
        %v949 = vand.u32 %v359, 4294901760
        %v950 = vsub.f32 %v359, %v949
        %v951 = vand.u32 %v950, 4294901760
        %952 = vmatpush1.xpose.msra.mxu0 %v951
        %953 = vmatprep.subr.mxu0 0.0
        %v954 = vand.u32 %v362, 4294901760
        %v955 = vsub.f32 %v362, %v954
        %v956 = vand.u32 %v955, 4294901760
        %957 = vmatpush1.xpose.msra.mxu0 %v956
        %958 = vmatprep.subr.mxu0 0.0
        %v959 = vand.u32 %v365, 4294901760
        %v960 = vsub.f32 %v365, %v959
        %v961 = vand.u32 %v960, 4294901760
        %962 = vmatpush1.xpose.msra.mxu0 %v961
        %963 = vmatprep.subr.mxu0 0.0
        %v964 = vand.u32 %v368, 4294901760
        %v965 = vsub.f32 %v368, %v964
        %v966 = vand.u32 %v965, 4294901760
        %967 = vmatpush1.xpose.msra.mxu0 %v966
        %968 = vmatprep.subr.mxu0 0.0
        %v969 = vand.u32 %v371, 4294901760
        %v970 = vsub.f32 %v371, %v969
        %v971 = vand.u32 %v970, 4294901760
        %972 = vmatpush1.xpose.msra.mxu0 %v971
        %973 = vmatprep.subr.mxu0 0.0
        %v974 = vand.u32 %v374, 4294901760
        %v975 = vsub.f32 %v374, %v974
        %v976 = vand.u32 %v975, 4294901760
        %977 = vmatpush1.xpose.msra.mxu0 %v976
        %978 = vmatprep.subr.mxu0 0.0
        %v979 = vand.u32 %v377, 4294901760
        %v980 = vsub.f32 %v377, %v979
        %v981 = vand.u32 %v980, 4294901760
        %982 = vmatpush1.xpose.msra.mxu0 %v981
        %983 = vmatprep.subr.mxu0 0.0
        %v984 = vand.u32 %v380, 4294901760
        %v985 = vsub.f32 %v380, %v984
        %v986 = vand.u32 %v985, 4294901760
        %987 = vmatpush1.xpose.msra.mxu0 %v986
        %988 = vmatprep.subr.mxu0 0.0
        %v989 = vand.u32 %v383, 4294901760
        %v990 = vsub.f32 %v383, %v989
        %v991 = vand.u32 %v990, 4294901760
        %992 = vmatpush1.xpose.msra.mxu0 %v991
        %993 = vmatprep.subr.mxu0 0.0
        %994 = vmatpush1.xpose.msra.mxu0 0.0
        %995 = vmatprep.subr.mxu0 0.0
        %996 = vmatpush1.xpose.msra.mxu0 0.0
        %997 = vmatprep.subr.mxu0 0.0
        %998 = vmatpush1.xpose.msra.mxu0 0.0
        %999 = vmatprep.subr.mxu0 0.0
        %1000 = vmatpush1.xpose.msra.mxu0 0.0
        %1001 = vmatprep.subr.mxu0 0.0
        %1002 = vmatpush1.xpose.msra.mxu0 0.0
        %1003 = vmatprep.subr.mxu0 0.0
        %1004 = vmatpush1.xpose.msra.mxu0 0.0
        %1005 = vmatprep.subr.mxu0 0.0
        %1006 = vmatpush1.xpose.msra.mxu0 0.0
        %1007 = vmatprep.subr.mxu0 0.0
        %1008 = vmatpush1.xpose.msra.mxu0 0.0
        %1009 = vmatprep.subr.mxu0 0.0
        %1010 = vmatpush1.xpose.msra.mxu0 0.0
        %1011 = vmatprep.subr.mxu0 0.0
        %1012 = vmatpush1.xpose.msra.mxu0 0.0
        %1013 = vmatprep.subr.mxu0 0.0
        %1014 = vmatpush1.xpose.msra.mxu0 0.0
        %1015 = vmatprep.subr.mxu0 0.0
        %1016 = vmatpush1.xpose.msra.mxu0 0.0
        %1017 = vmatprep.subr.mxu0 0.0
        %1018 = vmatpush1.xpose.msra.mxu0 0.0
        %1019 = vmatprep.subr.mxu0 0.0
        %1020 = vmatpush1.xpose.msra.mxu0 0.0
        %1021 = vmatprep.subr.mxu0 0.0
        %1022 = vmatpush1.xpose.msra.mxu0 0.0
        %1023 = vmatprep.subr.mxu0 0.0
        %1024 = vmatpush1.xpose.msra.mxu0 0.0
        %1025 = vmatprep.mubr.f32.mxu0 0.0
        %v1026 = vand.u32 %v326, 4294901760
        %1027 = vmatmul.mubr.f32.gmra.mrb[0].mxu0 %v1026
        %v1028 = vpop.f32.mrb[0].mxu0
        %v1029 = vadd.f32 %v886, %v1028
        %v1030 = vpop.f32.mrb[0].mxu0
        %1031 = vmatprep.mubr.f32.mxu0 0.0
        %v1032 = vand.u32 %v329, 4294901760
        %1033 = vmatmul.mubr.f32.gmra.mrb[0].mxu0 %v1032
        %v1034 = vpop.f32.mrb[0].mxu0
        %v1035 = vadd.f32 %v894, %v1034
        %v1036 = vpop.f32.mrb[0].mxu0
        %1037 = vmatprep.mubr.f32.mxu0 0.0
        %v1038 = vand.u32 %v332, 4294901760
        %1039 = vmatmul.mubr.f32.gmra.mrb[0].mxu0 %v1038
        %v1040 = vpop.f32.mrb[0].mxu0
        %v1041 = vadd.f32 %v902, %v1040
        %v1042 = vpop.f32.mrb[0].mxu0
        %1043 = vmatprep.mubr.f32.mxu0 0.0
        %v1044 = vand.u32 %v335, 4294901760
        %1045 = vmatmul.mubr.f32.gmra.mrb[0].mxu0 %v1044
        %v1046 = vpop.f32.mrb[0].mxu0
        %v1047 = vadd.f32 %v910, %v1046
        %v1048 = vpop.f32.mrb[0].mxu0
        %1049 = vdwg.mxu0
        %1050 = vmatprep.subr.mxu0 0.0
        %v1051 = vand.u32 %v338, 4294901760
        %1052 = vmatpush1.xpose.msra.mxu0 %v1051
        %1053 = vmatprep.subr.mxu0 0.0
        %v1054 = vand.u32 %v341, 4294901760
        %1055 = vmatpush1.xpose.msra.mxu0 %v1054
        %1056 = vmatprep.subr.mxu0 0.0
        %v1057 = vand.u32 %v344, 4294901760
        %1058 = vmatpush1.xpose.msra.mxu0 %v1057
        %1059 = vmatprep.subr.mxu0 0.0
        %v1060 = vand.u32 %v347, 4294901760
        %1061 = vmatpush1.xpose.msra.mxu0 %v1060
        %1062 = vmatprep.subr.mxu0 0.0
        %v1063 = vand.u32 %v350, 4294901760
        %1064 = vmatpush1.xpose.msra.mxu0 %v1063
        %1065 = vmatprep.subr.mxu0 0.0
        %v1066 = vand.u32 %v353, 4294901760
        %1067 = vmatpush1.xpose.msra.mxu0 %v1066
        %1068 = vmatprep.subr.mxu0 0.0
        %v1069 = vand.u32 %v356, 4294901760
        %1070 = vmatpush1.xpose.msra.mxu0 %v1069
        %1071 = vmatprep.subr.mxu0 0.0
        %v1072 = vand.u32 %v359, 4294901760
        %1073 = vmatpush1.xpose.msra.mxu0 %v1072
        %1074 = vmatprep.subr.mxu0 0.0
        %v1075 = vand.u32 %v362, 4294901760
        %1076 = vmatpush1.xpose.msra.mxu0 %v1075
        %1077 = vmatprep.subr.mxu0 0.0
        %v1078 = vand.u32 %v365, 4294901760
        %1079 = vmatpush1.xpose.msra.mxu0 %v1078
        %1080 = vmatprep.subr.mxu0 0.0
        %v1081 = vand.u32 %v368, 4294901760
        %1082 = vmatpush1.xpose.msra.mxu0 %v1081
        %1083 = vmatprep.subr.mxu0 0.0
        %v1084 = vand.u32 %v371, 4294901760
        %1085 = vmatpush1.xpose.msra.mxu0 %v1084
        %1086 = vmatprep.subr.mxu0 0.0
        %v1087 = vand.u32 %v374, 4294901760
        %1088 = vmatpush1.xpose.msra.mxu0 %v1087
        %1089 = vmatprep.subr.mxu0 0.0
        %v1090 = vand.u32 %v377, 4294901760
        %1091 = vmatpush1.xpose.msra.mxu0 %v1090
        %1092 = vmatprep.subr.mxu0 0.0
        %v1093 = vand.u32 %v380, 4294901760
        %1094 = vmatpush1.xpose.msra.mxu0 %v1093
        %1095 = vmatprep.subr.mxu0 0.0
        %v1096 = vand.u32 %v383, 4294901760
        %1097 = vmatpush1.xpose.msra.mxu0 %v1096
        %1098 = vmatprep.subr.mxu0 0.0
        %1099 = vmatpush1.xpose.msra.mxu0 0.0
        %1100 = vmatprep.subr.mxu0 0.0
        %1101 = vmatpush1.xpose.msra.mxu0 0.0
        %1102 = vmatprep.subr.mxu0 0.0
        %1103 = vmatpush1.xpose.msra.mxu0 0.0
        %1104 = vmatprep.subr.mxu0 0.0
        %1105 = vmatpush1.xpose.msra.mxu0 0.0
        %1106 = vmatprep.subr.mxu0 0.0
        %1107 = vmatpush1.xpose.msra.mxu0 0.0
        %1108 = vmatprep.subr.mxu0 0.0
        %1109 = vmatpush1.xpose.msra.mxu0 0.0
        %1110 = vmatprep.subr.mxu0 0.0
        %1111 = vmatpush1.xpose.msra.mxu0 0.0
        %1112 = vmatprep.subr.mxu0 0.0
        %1113 = vmatpush1.xpose.msra.mxu0 0.0
        %1114 = vmatprep.subr.mxu0 0.0
        %1115 = vmatpush1.xpose.msra.mxu0 0.0
        %1116 = vmatprep.subr.mxu0 0.0
        %1117 = vmatpush1.xpose.msra.mxu0 0.0
        %1118 = vmatprep.subr.mxu0 0.0
        %1119 = vmatpush1.xpose.msra.mxu0 0.0
        %1120 = vmatprep.subr.mxu0 0.0
        %1121 = vmatpush1.xpose.msra.mxu0 0.0
        %1122 = vmatprep.subr.mxu0 0.0
        %1123 = vmatpush1.xpose.msra.mxu0 0.0
        %1124 = vmatprep.subr.mxu0 0.0
        %1125 = vmatpush1.xpose.msra.mxu0 0.0
        %1126 = vmatprep.subr.mxu0 0.0
        %1127 = vmatpush1.xpose.msra.mxu0 0.0
        %1128 = vmatprep.subr.mxu0 0.0
        %1129 = vmatpush1.xpose.msra.mxu0 0.0
        %1130 = vmatprep.mubr.f32.mxu0 0.0
        %v1131 = vand.u32 %v326, 4294901760
        %1132 = vmatmul.mubr.f32.gmra.mrb[0].mxu0 %v1131
        %v1133 = vpop.f32.mrb[0].mxu0
        %v1134 = vadd.f32 %v1029, %v1133
        %v1135 = vpop.f32.mrb[0].mxu0
        %1136 = vmatprep.mubr.f32.mxu0 0.0
        %v1137 = vand.u32 %v329, 4294901760
        %1138 = vmatmul.mubr.f32.gmra.mrb[0].mxu0 %v1137
        %v1139 = vpop.f32.mrb[0].mxu0
        %v1140 = vadd.f32 %v1035, %v1139
        %v1141 = vpop.f32.mrb[0].mxu0
        %1142 = vmatprep.mubr.f32.mxu0 0.0
        %v1143 = vand.u32 %v332, 4294901760
        %1144 = vmatmul.mubr.f32.gmra.mrb[0].mxu0 %v1143
        %v1145 = vpop.f32.mrb[0].mxu0
        %v1146 = vadd.f32 %v1041, %v1145
        %v1147 = vpop.f32.mrb[0].mxu0
        %1148 = vmatprep.mubr.f32.mxu0 0.0
        %v1149 = vand.u32 %v335, 4294901760
        %1150 = vmatmul.mubr.f32.gmra.mrb[0].mxu0 %v1149
        %v1151 = vpop.f32.mrb[0].mxu0
        %v1152 = vadd.f32 %v1047, %v1151
        %v1153 = vpop.f32.mrb[0].mxu0
        %1154 = vdwg.mxu0
        %v1155 = vmax.f32 %v1134, 0.0
        %v1156 = vmax.f32 %v1140, 0.0
        %v1157 = vmax.f32 %v1146, 0.0
        %v1158 = vmax.f32 %v1152, 0.0
        %v1159 = vld [vmem:[%s3] sm:$0xff]
        %v1160 = vld [vmem:[%s3 + $0x8] sm:$0xff]
        %v1161 = vld [vmem:[%s3 + $0x10] sm:$0xff]
        %v1162 = vld [vmem:[%s3 + $0x18] sm:$0xff]
        %v1163 = vld [vmem:[%s4] sm:$0xff]
        %v1164 = vld [vmem:[%s4 + $0x8] sm:$0xff]
        %v1165 = vld [vmem:[%s4 + $0x10] sm:$0xff]
        %v1166 = vld [vmem:[%s4 + $0x18] sm:$0xff]
        %1168 = vset.pattern.permute.xlu0 0
        %1169 = vperm.xlu0 %1168, %v1163
        %v1170 = vpop.permute.xlu0 %1169
        %1173 = vset.pattern.permute.xlu0 0
        %1174 = vperm.xlu0 %1173, %v1164
        %v1175 = vpop.permute.xlu0 %1174
        %1178 = vset.pattern.permute.xlu0 0
        %1179 = vperm.xlu0 %1178, %v1165
        %v1180 = vpop.permute.xlu0 %1179
        %1183 = vset.pattern.permute.xlu0 0
        %1184 = vperm.xlu0 %1183, %v1166
        %v1185 = vpop.permute.xlu0 %1184
        %vm1187 = vcmask 261120
        %v1189 = vsel %vm1187, %v1159, 0
        %v1192 = vsel %vm1187, %v1160, 0
        %v1195 = vsel %vm1187, %v1161, 0
        %v1198 = vsel %vm1187, %v1162, 0
        %1200 = vmatprep.subr.mxu0 0.0
        %v1201 = vand.u32 %v1155, 4294901760
        %1202 = vmatpush1.msra.mxu0 %v1201
        %1203 = vmatprep.subr.mxu0 0.0
        %v1204 = vand.u32 %v1156, 4294901760
        %1205 = vmatpush1.msra.mxu0 %v1204
        %1206 = vmatprep.subr.mxu0 0.0
        %v1207 = vand.u32 %v1157, 4294901760
        %1208 = vmatpush1.msra.mxu0 %v1207
        %1209 = vmatprep.subr.mxu0 0.0
        %v1210 = vand.u32 %v1158, 4294901760
        %1211 = vmatpush1.msra.mxu0 %v1210
        %1212 = vmatprep.subr.mxu0 0.0
        %1213 = vmatpush1.msra.mxu0 0.0
        %1214 = vmatprep.subr.mxu0 0.0
        %1215 = vmatpush1.msra.mxu0 0.0
        %1216 = vmatprep.subr.mxu0 0.0
        %1217 = vmatpush1.msra.mxu0 0.0
        %1218 = vmatprep.subr.mxu0 0.0
        %1219 = vmatpush1.msra.mxu0 0.0
        %1220 = vmatprep.subr.mxu0 0.0
        %1221 = vmatpush1.msra.mxu0 0.0
        %1222 = vmatprep.subr.mxu0 0.0
        %1223 = vmatpush1.msra.mxu0 0.0
        %1224 = vmatprep.subr.mxu0 0.0
        %1225 = vmatpush1.msra.mxu0 0.0
        %1226 = vmatprep.subr.mxu0 0.0
        %1227 = vmatpush1.msra.mxu0 0.0
        %1228 = vmatprep.subr.mxu0 0.0
        %1229 = vmatpush1.msra.mxu0 0.0
        %1230 = vmatprep.subr.mxu0 0.0
        %1231 = vmatpush1.msra.mxu0 0.0
        %1232 = vmatprep.subr.mxu0 0.0
        %1233 = vmatpush1.msra.mxu0 0.0
        %1234 = vmatprep.subr.mxu0 0.0
        %1235 = vmatpush1.msra.mxu0 0.0
        %1236 = vmatprep.subr.mxu0 0.0
        %1237 = vmatpush1.msra.mxu0 0.0
        %1238 = vmatprep.subr.mxu0 0.0
        %1239 = vmatpush1.msra.mxu0 0.0
        %1240 = vmatprep.subr.mxu0 0.0
        %1241 = vmatpush1.msra.mxu0 0.0
        %1242 = vmatprep.subr.mxu0 0.0
        %1243 = vmatpush1.msra.mxu0 0.0
        %1244 = vmatprep.subr.mxu0 0.0
        %1245 = vmatpush1.msra.mxu0 0.0
        %1246 = vmatprep.subr.mxu0 0.0
        %1247 = vmatpush1.msra.mxu0 0.0
        %1248 = vmatprep.subr.mxu0 0.0
        %1249 = vmatpush1.msra.mxu0 0.0
        %1250 = vmatprep.subr.mxu0 0.0
        %1251 = vmatpush1.msra.mxu0 0.0
        %1252 = vmatprep.subr.mxu0 0.0
        %1253 = vmatpush1.msra.mxu0 0.0
        %1254 = vmatprep.subr.mxu0 0.0
        %1255 = vmatpush1.msra.mxu0 0.0
        %1256 = vmatprep.subr.mxu0 0.0
        %1257 = vmatpush1.msra.mxu0 0.0
        %1258 = vmatprep.subr.mxu0 0.0
        %1259 = vmatpush1.msra.mxu0 0.0
        %1260 = vmatprep.subr.mxu0 0.0
        %1261 = vmatpush1.msra.mxu0 0.0
        %1262 = vmatprep.subr.mxu0 0.0
        %1263 = vmatpush1.msra.mxu0 0.0
        %1264 = vmatprep.subr.mxu0 0.0
        %1265 = vmatpush1.msra.mxu0 0.0
        %1266 = vmatprep.subr.mxu0 0.0
        %1267 = vmatpush1.msra.mxu0 0.0
        %1268 = vmatprep.mubr.f32.mxu0 0.0
        %v1269 = vand.u32 %v1189, 4294901760
        %v1270 = vsub.f32 %v1189, %v1269
        %v1271 = vand.u32 %v1270, 4294901760
        %v1272 = vsub.f32 %v1270, %v1271
        %v1273 = vand.u32 %v1272, 4294901760
        %1274 = vmatmul.mubr.f32.gmra.mrb[0].mxu0 %v1273
        %v1275 = vpop.f32.mrb[0].mxu0
        %v1276 = vadd.f32 %v1170, %v1275
        %v1277 = vpop.f32.mrb[0].mxu0
        %1278 = vmatprep.mubr.f32.mxu0 0.0
        %v1279 = vand.u32 %v1192, 4294901760
        %v1280 = vsub.f32 %v1192, %v1279
        %v1281 = vand.u32 %v1280, 4294901760
        %v1282 = vsub.f32 %v1280, %v1281
        %v1283 = vand.u32 %v1282, 4294901760
        %1284 = vmatmul.mubr.f32.gmra.mrb[0].mxu0 %v1283
        %v1285 = vpop.f32.mrb[0].mxu0
        %v1286 = vadd.f32 %v1175, %v1285
        %v1287 = vpop.f32.mrb[0].mxu0
        %1288 = vmatprep.mubr.f32.mxu0 0.0
        %v1289 = vand.u32 %v1195, 4294901760
        %v1290 = vsub.f32 %v1195, %v1289
        %v1291 = vand.u32 %v1290, 4294901760
        %v1292 = vsub.f32 %v1290, %v1291
        %v1293 = vand.u32 %v1292, 4294901760
        %1294 = vmatmul.mubr.f32.gmra.mrb[0].mxu0 %v1293
        %v1295 = vpop.f32.mrb[0].mxu0
        %v1296 = vadd.f32 %v1180, %v1295
        %v1297 = vpop.f32.mrb[0].mxu0
        %1298 = vmatprep.mubr.f32.mxu0 0.0
        %v1299 = vand.u32 %v1198, 4294901760
        %v1300 = vsub.f32 %v1198, %v1299
        %v1301 = vand.u32 %v1300, 4294901760
        %v1302 = vsub.f32 %v1300, %v1301
        %v1303 = vand.u32 %v1302, 4294901760
        %1304 = vmatmul.mubr.f32.gmra.mrb[0].mxu0 %v1303
        %v1305 = vpop.f32.mrb[0].mxu0
        %v1306 = vadd.f32 %v1185, %v1305
        %v1307 = vpop.f32.mrb[0].mxu0
        %1308 = vdwg.mxu0
        %1309 = vmatprep.subr.mxu0 0.0
        %v1310 = vand.u32 %v1155, 4294901760
        %v1311 = vsub.f32 %v1155, %v1310
        %v1312 = vand.u32 %v1311, 4294901760
        %v1313 = vsub.f32 %v1311, %v1312
        %v1314 = vand.u32 %v1313, 4294901760
        %1315 = vmatpush1.msra.mxu0 %v1314
        %1316 = vmatprep.subr.mxu0 0.0
        %v1317 = vand.u32 %v1156, 4294901760
        %v1318 = vsub.f32 %v1156, %v1317
        %v1319 = vand.u32 %v1318, 4294901760
        %v1320 = vsub.f32 %v1318, %v1319
        %v1321 = vand.u32 %v1320, 4294901760
        %1322 = vmatpush1.msra.mxu0 %v1321
        %1323 = vmatprep.subr.mxu0 0.0
        %v1324 = vand.u32 %v1157, 4294901760
        %v1325 = vsub.f32 %v1157, %v1324
        %v1326 = vand.u32 %v1325, 4294901760
        %v1327 = vsub.f32 %v1325, %v1326
        %v1328 = vand.u32 %v1327, 4294901760
        %1329 = vmatpush1.msra.mxu0 %v1328
        %1330 = vmatprep.subr.mxu0 0.0
        %v1331 = vand.u32 %v1158, 4294901760
        %v1332 = vsub.f32 %v1158, %v1331
        %v1333 = vand.u32 %v1332, 4294901760
        %v1334 = vsub.f32 %v1332, %v1333
        %v1335 = vand.u32 %v1334, 4294901760
        %1336 = vmatpush1.msra.mxu0 %v1335
        %1337 = vmatprep.subr.mxu0 0.0
        %1338 = vmatpush1.msra.mxu0 0.0
        %1339 = vmatprep.subr.mxu0 0.0
        %1340 = vmatpush1.msra.mxu0 0.0
        %1341 = vmatprep.subr.mxu0 0.0
        %1342 = vmatpush1.msra.mxu0 0.0
        %1343 = vmatprep.subr.mxu0 0.0
        %1344 = vmatpush1.msra.mxu0 0.0
        %1345 = vmatprep.subr.mxu0 0.0
        %1346 = vmatpush1.msra.mxu0 0.0
        %1347 = vmatprep.subr.mxu0 0.0
        %1348 = vmatpush1.msra.mxu0 0.0
        %1349 = vmatprep.subr.mxu0 0.0
        %1350 = vmatpush1.msra.mxu0 0.0
        %1351 = vmatprep.subr.mxu0 0.0
        %1352 = vmatpush1.msra.mxu0 0.0
        %1353 = vmatprep.subr.mxu0 0.0
        %1354 = vmatpush1.msra.mxu0 0.0
        %1355 = vmatprep.subr.mxu0 0.0
        %1356 = vmatpush1.msra.mxu0 0.0
        %1357 = vmatprep.subr.mxu0 0.0
        %1358 = vmatpush1.msra.mxu0 0.0
        %1359 = vmatprep.subr.mxu0 0.0
        %1360 = vmatpush1.msra.mxu0 0.0
        %1361 = vmatprep.subr.mxu0 0.0
        %1362 = vmatpush1.msra.mxu0 0.0
        %1363 = vmatprep.subr.mxu0 0.0
        %1364 = vmatpush1.msra.mxu0 0.0
        %1365 = vmatprep.subr.mxu0 0.0
        %1366 = vmatpush1.msra.mxu0 0.0
        %1367 = vmatprep.subr.mxu0 0.0
        %1368 = vmatpush1.msra.mxu0 0.0
        %1369 = vmatprep.subr.mxu0 0.0
        %1370 = vmatpush1.msra.mxu0 0.0
        %1371 = vmatprep.subr.mxu0 0.0
        %1372 = vmatpush1.msra.mxu0 0.0
        %1373 = vmatprep.subr.mxu0 0.0
        %1374 = vmatpush1.msra.mxu0 0.0
        %1375 = vmatprep.subr.mxu0 0.0
        %1376 = vmatpush1.msra.mxu0 0.0
        %1377 = vmatprep.subr.mxu0 0.0
        %1378 = vmatpush1.msra.mxu0 0.0
        %1379 = vmatprep.subr.mxu0 0.0
        %1380 = vmatpush1.msra.mxu0 0.0
        %1381 = vmatprep.subr.mxu0 0.0
        %1382 = vmatpush1.msra.mxu0 0.0
        %1383 = vmatprep.subr.mxu0 0.0
        %1384 = vmatpush1.msra.mxu0 0.0
        %1385 = vmatprep.subr.mxu0 0.0
        %1386 = vmatpush1.msra.mxu0 0.0
        %1387 = vmatprep.subr.mxu0 0.0
        %1388 = vmatpush1.msra.mxu0 0.0
        %1389 = vmatprep.subr.mxu0 0.0
        %1390 = vmatpush1.msra.mxu0 0.0
        %1391 = vmatprep.subr.mxu0 0.0
        %1392 = vmatpush1.msra.mxu0 0.0
        %1393 = vmatprep.mubr.f32.mxu0 0.0
        %v1394 = vand.u32 %v1189, 4294901760
        %1395 = vmatmul.mubr.f32.gmra.mrb[0].mxu0 %v1394
        %v1396 = vpop.f32.mrb[0].mxu0
        %v1397 = vadd.f32 %v1276, %v1396
        %v1398 = vpop.f32.mrb[0].mxu0
        %1399 = vmatprep.mubr.f32.mxu0 0.0
        %v1400 = vand.u32 %v1192, 4294901760
        %1401 = vmatmul.mubr.f32.gmra.mrb[0].mxu0 %v1400
        %v1402 = vpop.f32.mrb[0].mxu0
        %v1403 = vadd.f32 %v1286, %v1402
        %v1404 = vpop.f32.mrb[0].mxu0
        %1405 = vmatprep.mubr.f32.mxu0 0.0
        %v1406 = vand.u32 %v1195, 4294901760
        %1407 = vmatmul.mubr.f32.gmra.mrb[0].mxu0 %v1406
        %v1408 = vpop.f32.mrb[0].mxu0
        %v1409 = vadd.f32 %v1296, %v1408
        %v1410 = vpop.f32.mrb[0].mxu0
        %1411 = vmatprep.mubr.f32.mxu0 0.0
        %v1412 = vand.u32 %v1198, 4294901760
        %1413 = vmatmul.mubr.f32.gmra.mrb[0].mxu0 %v1412
        %v1414 = vpop.f32.mrb[0].mxu0
        %v1415 = vadd.f32 %v1306, %v1414
        %v1416 = vpop.f32.mrb[0].mxu0
        %1417 = vdwg.mxu0
        %1418 = vmatprep.subr.mxu0 0.0
        %v1419 = vand.u32 %v1155, 4294901760
        %v1420 = vsub.f32 %v1155, %v1419
        %1421 = vmatpush1.msra.mxu0 %v1420
        %1422 = vmatprep.subr.mxu0 0.0
        %v1423 = vand.u32 %v1156, 4294901760
        %v1424 = vsub.f32 %v1156, %v1423
        %1425 = vmatpush1.msra.mxu0 %v1424
        %1426 = vmatprep.subr.mxu0 0.0
        %v1427 = vand.u32 %v1157, 4294901760
        %v1428 = vsub.f32 %v1157, %v1427
        %1429 = vmatpush1.msra.mxu0 %v1428
        %1430 = vmatprep.subr.mxu0 0.0
        %v1431 = vand.u32 %v1158, 4294901760
        %v1432 = vsub.f32 %v1158, %v1431
        %1433 = vmatpush1.msra.mxu0 %v1432
        %1434 = vmatprep.subr.mxu0 0.0
        %1435 = vmatpush1.msra.mxu0 0.0
        %1436 = vmatprep.subr.mxu0 0.0
        %1437 = vmatpush1.msra.mxu0 0.0
        %1438 = vmatprep.subr.mxu0 0.0
        %1439 = vmatpush1.msra.mxu0 0.0
        %1440 = vmatprep.subr.mxu0 0.0
        %1441 = vmatpush1.msra.mxu0 0.0
        %1442 = vmatprep.subr.mxu0 0.0
        %1443 = vmatpush1.msra.mxu0 0.0
        %1444 = vmatprep.subr.mxu0 0.0
        %1445 = vmatpush1.msra.mxu0 0.0
        %1446 = vmatprep.subr.mxu0 0.0
        %1447 = vmatpush1.msra.mxu0 0.0
        %1448 = vmatprep.subr.mxu0 0.0
        %1449 = vmatpush1.msra.mxu0 0.0
        %1450 = vmatprep.subr.mxu0 0.0
        %1451 = vmatpush1.msra.mxu0 0.0
        %1452 = vmatprep.subr.mxu0 0.0
        %1453 = vmatpush1.msra.mxu0 0.0
        %1454 = vmatprep.subr.mxu0 0.0
        %1455 = vmatpush1.msra.mxu0 0.0
        %1456 = vmatprep.subr.mxu0 0.0
        %1457 = vmatpush1.msra.mxu0 0.0
        %1458 = vmatprep.subr.mxu0 0.0
        %1459 = vmatpush1.msra.mxu0 0.0
        %1460 = vmatprep.subr.mxu0 0.0
        %1461 = vmatpush1.msra.mxu0 0.0
        %1462 = vmatprep.subr.mxu0 0.0
        %1463 = vmatpush1.msra.mxu0 0.0
        %1464 = vmatprep.subr.mxu0 0.0
        %1465 = vmatpush1.msra.mxu0 0.0
        %1466 = vmatprep.subr.mxu0 0.0
        %1467 = vmatpush1.msra.mxu0 0.0
        %1468 = vmatprep.subr.mxu0 0.0
        %1469 = vmatpush1.msra.mxu0 0.0
        %1470 = vmatprep.subr.mxu0 0.0
        %1471 = vmatpush1.msra.mxu0 0.0
        %1472 = vmatprep.subr.mxu0 0.0
        %1473 = vmatpush1.msra.mxu0 0.0
        %1474 = vmatprep.subr.mxu0 0.0
        %1475 = vmatpush1.msra.mxu0 0.0
        %1476 = vmatprep.subr.mxu0 0.0
        %1477 = vmatpush1.msra.mxu0 0.0
        %1478 = vmatprep.subr.mxu0 0.0
        %1479 = vmatpush1.msra.mxu0 0.0
        %1480 = vmatprep.subr.mxu0 0.0
        %1481 = vmatpush1.msra.mxu0 0.0
        %1482 = vmatprep.subr.mxu0 0.0
        %1483 = vmatpush1.msra.mxu0 0.0
        %1484 = vmatprep.subr.mxu0 0.0
        %1485 = vmatpush1.msra.mxu0 0.0
        %1486 = vmatprep.subr.mxu0 0.0
        %1487 = vmatpush1.msra.mxu0 0.0
        %1488 = vmatprep.subr.mxu0 0.0
        %1489 = vmatpush1.msra.mxu0 0.0
        %1490 = vmatprep.mubr.f32.mxu0 0.0
        %v1491 = vand.u32 %v1189, 4294901760
        %v1492 = vsub.f32 %v1189, %v1491
        %1493 = vmatmul.mubr.f32.gmra.mrb[0].mxu0 %v1492
        %v1494 = vpop.f32.mrb[0].mxu0
        %v1495 = vadd.f32 %v1397, %v1494
        %v1496 = vpop.f32.mrb[0].mxu0
        %1497 = vmatprep.mubr.f32.mxu0 0.0
        %v1498 = vand.u32 %v1192, 4294901760
        %v1499 = vsub.f32 %v1192, %v1498
        %1500 = vmatmul.mubr.f32.gmra.mrb[0].mxu0 %v1499
        %v1501 = vpop.f32.mrb[0].mxu0
        %v1502 = vadd.f32 %v1403, %v1501
        %v1503 = vpop.f32.mrb[0].mxu0
        %1504 = vmatprep.mubr.f32.mxu0 0.0
        %v1505 = vand.u32 %v1195, 4294901760
        %v1506 = vsub.f32 %v1195, %v1505
        %1507 = vmatmul.mubr.f32.gmra.mrb[0].mxu0 %v1506
        %v1508 = vpop.f32.mrb[0].mxu0
        %v1509 = vadd.f32 %v1409, %v1508
        %v1510 = vpop.f32.mrb[0].mxu0
        %1511 = vmatprep.mubr.f32.mxu0 0.0
        %v1512 = vand.u32 %v1198, 4294901760
        %v1513 = vsub.f32 %v1198, %v1512
        %1514 = vmatmul.mubr.f32.gmra.mrb[0].mxu0 %v1513
        %v1515 = vpop.f32.mrb[0].mxu0
        %v1516 = vadd.f32 %v1415, %v1515
        %v1517 = vpop.f32.mrb[0].mxu0
        %1518 = vdwg.mxu0
        %1519 = vmatprep.subr.mxu0 0.0
        %v1520 = vand.u32 %v1155, 4294901760
        %1521 = vmatpush1.msra.mxu0 %v1520
        %1522 = vmatprep.subr.mxu0 0.0
        %v1523 = vand.u32 %v1156, 4294901760
        %1524 = vmatpush1.msra.mxu0 %v1523
        %1525 = vmatprep.subr.mxu0 0.0
        %v1526 = vand.u32 %v1157, 4294901760
        %1527 = vmatpush1.msra.mxu0 %v1526
        %1528 = vmatprep.subr.mxu0 0.0
        %v1529 = vand.u32 %v1158, 4294901760
        %1530 = vmatpush1.msra.mxu0 %v1529
        %1531 = vmatprep.subr.mxu0 0.0
        %1532 = vmatpush1.msra.mxu0 0.0
        %1533 = vmatprep.subr.mxu0 0.0
        %1534 = vmatpush1.msra.mxu0 0.0
        %1535 = vmatprep.subr.mxu0 0.0
        %1536 = vmatpush1.msra.mxu0 0.0
        %1537 = vmatprep.subr.mxu0 0.0
        %1538 = vmatpush1.msra.mxu0 0.0
        %1539 = vmatprep.subr.mxu0 0.0
        %1540 = vmatpush1.msra.mxu0 0.0
        %1541 = vmatprep.subr.mxu0 0.0
        %1542 = vmatpush1.msra.mxu0 0.0
        %1543 = vmatprep.subr.mxu0 0.0
        %1544 = vmatpush1.msra.mxu0 0.0
        %1545 = vmatprep.subr.mxu0 0.0
        %1546 = vmatpush1.msra.mxu0 0.0
        %1547 = vmatprep.subr.mxu0 0.0
        %1548 = vmatpush1.msra.mxu0 0.0
        %1549 = vmatprep.subr.mxu0 0.0
        %1550 = vmatpush1.msra.mxu0 0.0
        %1551 = vmatprep.subr.mxu0 0.0
        %1552 = vmatpush1.msra.mxu0 0.0
        %1553 = vmatprep.subr.mxu0 0.0
        %1554 = vmatpush1.msra.mxu0 0.0
        %1555 = vmatprep.subr.mxu0 0.0
        %1556 = vmatpush1.msra.mxu0 0.0
        %1557 = vmatprep.subr.mxu0 0.0
        %1558 = vmatpush1.msra.mxu0 0.0
        %1559 = vmatprep.subr.mxu0 0.0
        %1560 = vmatpush1.msra.mxu0 0.0
        %1561 = vmatprep.subr.mxu0 0.0
        %1562 = vmatpush1.msra.mxu0 0.0
        %1563 = vmatprep.subr.mxu0 0.0
        %1564 = vmatpush1.msra.mxu0 0.0
        %1565 = vmatprep.subr.mxu0 0.0
        %1566 = vmatpush1.msra.mxu0 0.0
        %1567 = vmatprep.subr.mxu0 0.0
        %1568 = vmatpush1.msra.mxu0 0.0
        %1569 = vmatprep.subr.mxu0 0.0
        %1570 = vmatpush1.msra.mxu0 0.0
        %1571 = vmatprep.subr.mxu0 0.0
        %1572 = vmatpush1.msra.mxu0 0.0
        %1573 = vmatprep.subr.mxu0 0.0
        %1574 = vmatpush1.msra.mxu0 0.0
        %1575 = vmatprep.subr.mxu0 0.0
        %1576 = vmatpush1.msra.mxu0 0.0
        %1577 = vmatprep.subr.mxu0 0.0
        %1578 = vmatpush1.msra.mxu0 0.0
        %1579 = vmatprep.subr.mxu0 0.0
        %1580 = vmatpush1.msra.mxu0 0.0
        %1581 = vmatprep.subr.mxu0 0.0
        %1582 = vmatpush1.msra.mxu0 0.0
        %1583 = vmatprep.subr.mxu0 0.0
        %1584 = vmatpush1.msra.mxu0 0.0
        %1585 = vmatprep.subr.mxu0 0.0
        %1586 = vmatpush1.msra.mxu0 0.0
        %1587 = vmatprep.mubr.f32.mxu0 0.0
        %v1588 = vand.u32 %v1189, 4294901760
        %v1589 = vsub.f32 %v1189, %v1588
        %v1590 = vand.u32 %v1589, 4294901760
        %1591 = vmatmul.mubr.f32.gmra.mrb[0].mxu0 %v1590
        %v1592 = vpop.f32.mrb[0].mxu0
        %v1593 = vadd.f32 %v1495, %v1592
        %v1594 = vpop.f32.mrb[0].mxu0
        %1595 = vmatprep.mubr.f32.mxu0 0.0
        %v1596 = vand.u32 %v1192, 4294901760
        %v1597 = vsub.f32 %v1192, %v1596
        %v1598 = vand.u32 %v1597, 4294901760
        %1599 = vmatmul.mubr.f32.gmra.mrb[0].mxu0 %v1598
        %v1600 = vpop.f32.mrb[0].mxu0
        %v1601 = vadd.f32 %v1502, %v1600
        %v1602 = vpop.f32.mrb[0].mxu0
        %1603 = vmatprep.mubr.f32.mxu0 0.0
        %v1604 = vand.u32 %v1195, 4294901760
        %v1605 = vsub.f32 %v1195, %v1604
        %v1606 = vand.u32 %v1605, 4294901760
        %1607 = vmatmul.mubr.f32.gmra.mrb[0].mxu0 %v1606
        %v1608 = vpop.f32.mrb[0].mxu0
        %v1609 = vadd.f32 %v1509, %v1608
        %v1610 = vpop.f32.mrb[0].mxu0
        %1611 = vmatprep.mubr.f32.mxu0 0.0
        %v1612 = vand.u32 %v1198, 4294901760
        %v1613 = vsub.f32 %v1198, %v1612
        %v1614 = vand.u32 %v1613, 4294901760
        %1615 = vmatmul.mubr.f32.gmra.mrb[0].mxu0 %v1614
        %v1616 = vpop.f32.mrb[0].mxu0
        %v1617 = vadd.f32 %v1516, %v1616
        %v1618 = vpop.f32.mrb[0].mxu0
        %1619 = vdwg.mxu0
        %1620 = vmatprep.subr.mxu0 0.0
        %v1621 = vand.u32 %v1155, 4294901760
        %v1622 = vsub.f32 %v1155, %v1621
        %v1623 = vand.u32 %v1622, 4294901760
        %1624 = vmatpush1.msra.mxu0 %v1623
        %1625 = vmatprep.subr.mxu0 0.0
        %v1626 = vand.u32 %v1156, 4294901760
        %v1627 = vsub.f32 %v1156, %v1626
        %v1628 = vand.u32 %v1627, 4294901760
        %1629 = vmatpush1.msra.mxu0 %v1628
        %1630 = vmatprep.subr.mxu0 0.0
        %v1631 = vand.u32 %v1157, 4294901760
        %v1632 = vsub.f32 %v1157, %v1631
        %v1633 = vand.u32 %v1632, 4294901760
        %1634 = vmatpush1.msra.mxu0 %v1633
        %1635 = vmatprep.subr.mxu0 0.0
        %v1636 = vand.u32 %v1158, 4294901760
        %v1637 = vsub.f32 %v1158, %v1636
        %v1638 = vand.u32 %v1637, 4294901760
        %1639 = vmatpush1.msra.mxu0 %v1638
        %1640 = vmatprep.subr.mxu0 0.0
        %1641 = vmatpush1.msra.mxu0 0.0
        %1642 = vmatprep.subr.mxu0 0.0
        %1643 = vmatpush1.msra.mxu0 0.0
        %1644 = vmatprep.subr.mxu0 0.0
        %1645 = vmatpush1.msra.mxu0 0.0
        %1646 = vmatprep.subr.mxu0 0.0
        %1647 = vmatpush1.msra.mxu0 0.0
        %1648 = vmatprep.subr.mxu0 0.0
        %1649 = vmatpush1.msra.mxu0 0.0
        %1650 = vmatprep.subr.mxu0 0.0
        %1651 = vmatpush1.msra.mxu0 0.0
        %1652 = vmatprep.subr.mxu0 0.0
        %1653 = vmatpush1.msra.mxu0 0.0
        %1654 = vmatprep.subr.mxu0 0.0
        %1655 = vmatpush1.msra.mxu0 0.0
        %1656 = vmatprep.subr.mxu0 0.0
        %1657 = vmatpush1.msra.mxu0 0.0
        %1658 = vmatprep.subr.mxu0 0.0
        %1659 = vmatpush1.msra.mxu0 0.0
        %1660 = vmatprep.subr.mxu0 0.0
        %1661 = vmatpush1.msra.mxu0 0.0
        %1662 = vmatprep.subr.mxu0 0.0
        %1663 = vmatpush1.msra.mxu0 0.0
        %1664 = vmatprep.subr.mxu0 0.0
        %1665 = vmatpush1.msra.mxu0 0.0
        %1666 = vmatprep.subr.mxu0 0.0
        %1667 = vmatpush1.msra.mxu0 0.0
        %1668 = vmatprep.subr.mxu0 0.0
        %1669 = vmatpush1.msra.mxu0 0.0
        %1670 = vmatprep.subr.mxu0 0.0
        %1671 = vmatpush1.msra.mxu0 0.0
        %1672 = vmatprep.subr.mxu0 0.0
        %1673 = vmatpush1.msra.mxu0 0.0
        %1674 = vmatprep.subr.mxu0 0.0
        %1675 = vmatpush1.msra.mxu0 0.0
        %1676 = vmatprep.subr.mxu0 0.0
        %1677 = vmatpush1.msra.mxu0 0.0
        %1678 = vmatprep.subr.mxu0 0.0
        %1679 = vmatpush1.msra.mxu0 0.0
        %1680 = vmatprep.subr.mxu0 0.0
        %1681 = vmatpush1.msra.mxu0 0.0
        %1682 = vmatprep.subr.mxu0 0.0
        %1683 = vmatpush1.msra.mxu0 0.0
        %1684 = vmatprep.subr.mxu0 0.0
        %1685 = vmatpush1.msra.mxu0 0.0
        %1686 = vmatprep.subr.mxu0 0.0
        %1687 = vmatpush1.msra.mxu0 0.0
        %1688 = vmatprep.subr.mxu0 0.0
        %1689 = vmatpush1.msra.mxu0 0.0
        %1690 = vmatprep.subr.mxu0 0.0
        %1691 = vmatpush1.msra.mxu0 0.0
        %1692 = vmatprep.subr.mxu0 0.0
        %1693 = vmatpush1.msra.mxu0 0.0
        %1694 = vmatprep.subr.mxu0 0.0
        %1695 = vmatpush1.msra.mxu0 0.0
        %1696 = vmatprep.mubr.f32.mxu0 0.0
        %v1697 = vand.u32 %v1189, 4294901760
        %1698 = vmatmul.mubr.f32.gmra.mrb[0].mxu0 %v1697
        %v1699 = vpop.f32.mrb[0].mxu0
        %v1700 = vadd.f32 %v1593, %v1699
        %v1701 = vpop.f32.mrb[0].mxu0
        %1702 = vmatprep.mubr.f32.mxu0 0.0
        %v1703 = vand.u32 %v1192, 4294901760
        %1704 = vmatmul.mubr.f32.gmra.mrb[0].mxu0 %v1703
        %v1705 = vpop.f32.mrb[0].mxu0
        %v1706 = vadd.f32 %v1601, %v1705
        %v1707 = vpop.f32.mrb[0].mxu0
        %1708 = vmatprep.mubr.f32.mxu0 0.0
        %v1709 = vand.u32 %v1195, 4294901760
        %1710 = vmatmul.mubr.f32.gmra.mrb[0].mxu0 %v1709
        %v1711 = vpop.f32.mrb[0].mxu0
        %v1712 = vadd.f32 %v1609, %v1711
        %v1713 = vpop.f32.mrb[0].mxu0
        %1714 = vmatprep.mubr.f32.mxu0 0.0
        %v1715 = vand.u32 %v1198, 4294901760
        %1716 = vmatmul.mubr.f32.gmra.mrb[0].mxu0 %v1715
        %v1717 = vpop.f32.mrb[0].mxu0
        %v1718 = vadd.f32 %v1617, %v1717
        %v1719 = vpop.f32.mrb[0].mxu0
        %1720 = vdwg.mxu0
        %1721 = vmatprep.subr.mxu0 0.0
        %v1722 = vand.u32 %v1155, 4294901760
        %1723 = vmatpush1.msra.mxu0 %v1722
        %1724 = vmatprep.subr.mxu0 0.0
        %v1725 = vand.u32 %v1156, 4294901760
        %1726 = vmatpush1.msra.mxu0 %v1725
        %1727 = vmatprep.subr.mxu0 0.0
        %v1728 = vand.u32 %v1157, 4294901760
        %1729 = vmatpush1.msra.mxu0 %v1728
        %1730 = vmatprep.subr.mxu0 0.0
        %v1731 = vand.u32 %v1158, 4294901760
        %1732 = vmatpush1.msra.mxu0 %v1731
        %1733 = vmatprep.subr.mxu0 0.0
        %1734 = vmatpush1.msra.mxu0 0.0
        %1735 = vmatprep.subr.mxu0 0.0
        %1736 = vmatpush1.msra.mxu0 0.0
        %1737 = vmatprep.subr.mxu0 0.0
        %1738 = vmatpush1.msra.mxu0 0.0
        %1739 = vmatprep.subr.mxu0 0.0
        %1740 = vmatpush1.msra.mxu0 0.0
        %1741 = vmatprep.subr.mxu0 0.0
        %1742 = vmatpush1.msra.mxu0 0.0
        %1743 = vmatprep.subr.mxu0 0.0
        %1744 = vmatpush1.msra.mxu0 0.0
        %1745 = vmatprep.subr.mxu0 0.0
        %1746 = vmatpush1.msra.mxu0 0.0
        %1747 = vmatprep.subr.mxu0 0.0
        %1748 = vmatpush1.msra.mxu0 0.0
        %1749 = vmatprep.subr.mxu0 0.0
        %1750 = vmatpush1.msra.mxu0 0.0
        %1751 = vmatprep.subr.mxu0 0.0
        %1752 = vmatpush1.msra.mxu0 0.0
        %1753 = vmatprep.subr.mxu0 0.0
        %1754 = vmatpush1.msra.mxu0 0.0
        %1755 = vmatprep.subr.mxu0 0.0
        %1756 = vmatpush1.msra.mxu0 0.0
        %1757 = vmatprep.subr.mxu0 0.0
        %1758 = vmatpush1.msra.mxu0 0.0
        %1759 = vmatprep.subr.mxu0 0.0
        %1760 = vmatpush1.msra.mxu0 0.0
        %1761 = vmatprep.subr.mxu0 0.0
        %1762 = vmatpush1.msra.mxu0 0.0
        %1763 = vmatprep.subr.mxu0 0.0
        %1764 = vmatpush1.msra.mxu0 0.0
        %1765 = vmatprep.subr.mxu0 0.0
        %1766 = vmatpush1.msra.mxu0 0.0
        %1767 = vmatprep.subr.mxu0 0.0
        %1768 = vmatpush1.msra.mxu0 0.0
        %1769 = vmatprep.subr.mxu0 0.0
        %1770 = vmatpush1.msra.mxu0 0.0
        %1771 = vmatprep.subr.mxu0 0.0
        %1772 = vmatpush1.msra.mxu0 0.0
        %1773 = vmatprep.subr.mxu0 0.0
        %1774 = vmatpush1.msra.mxu0 0.0
        %1775 = vmatprep.subr.mxu0 0.0
        %1776 = vmatpush1.msra.mxu0 0.0
        %1777 = vmatprep.subr.mxu0 0.0
        %1778 = vmatpush1.msra.mxu0 0.0
        %1779 = vmatprep.subr.mxu0 0.0
        %1780 = vmatpush1.msra.mxu0 0.0
        %1781 = vmatprep.subr.mxu0 0.0
        %1782 = vmatpush1.msra.mxu0 0.0
        %1783 = vmatprep.subr.mxu0 0.0
        %1784 = vmatpush1.msra.mxu0 0.0
        %1785 = vmatprep.subr.mxu0 0.0
        %1786 = vmatpush1.msra.mxu0 0.0
        %1787 = vmatprep.subr.mxu0 0.0
        %1788 = vmatpush1.msra.mxu0 0.0
        %1789 = vmatprep.mubr.f32.mxu0 0.0
        %v1790 = vand.u32 %v1189, 4294901760
        %1791 = vmatmul.mubr.f32.gmra.mrb[0].mxu0 %v1790
        %v1792 = vpop.f32.mrb[0].mxu0
        %v1793 = vadd.f32 %v1700, %v1792
        %v1794 = vpop.f32.mrb[0].mxu0
        %1795 = vmatprep.mubr.f32.mxu0 0.0
        %v1796 = vand.u32 %v1192, 4294901760
        %1797 = vmatmul.mubr.f32.gmra.mrb[0].mxu0 %v1796
        %v1798 = vpop.f32.mrb[0].mxu0
        %v1799 = vadd.f32 %v1706, %v1798
        %v1800 = vpop.f32.mrb[0].mxu0
        %1801 = vmatprep.mubr.f32.mxu0 0.0
        %v1802 = vand.u32 %v1195, 4294901760
        %1803 = vmatmul.mubr.f32.gmra.mrb[0].mxu0 %v1802
        %v1804 = vpop.f32.mrb[0].mxu0
        %v1805 = vadd.f32 %v1712, %v1804
        %v1806 = vpop.f32.mrb[0].mxu0
        %1807 = vmatprep.mubr.f32.mxu0 0.0
        %v1808 = vand.u32 %v1198, 4294901760
        %1809 = vmatmul.mubr.f32.gmra.mrb[0].mxu0 %v1808
        %v1810 = vpop.f32.mrb[0].mxu0
        %v1811 = vadd.f32 %v1718, %v1810
        %v1812 = vpop.f32.mrb[0].mxu0
        %1813 = vdwg.mxu0
        %v1814 = vmax.f32 %v1793, 0.0
        %v1815 = vmax.f32 %v1799, 0.0
        %v1816 = vmax.f32 %v1805, 0.0
        %v1817 = vmax.f32 %v1811, 0.0
        %v1818 = vld [vmem:[%s5] sm:$0x1]
        %v1819 = vld [vmem:[#allocation2] sm:$0x1]
        %1821 = vset.pattern.permute.xlu0 0
        %1822 = vperm.xlu0 %1821, %v1819
        %v1823 = vpop.permute.xlu0 %1822
        %v1825 = vlaneseq
        %v1826 = vshrl.u32 %v1825, 7
        %v1827 = vsub.s32 0, %v1826
        %v1828 = vrot.slane %v1823, %v1827
        %v1830 = vsel %vm1187, %v1818, 0
        %1832 = vmatprep.subr.mxu0 0.0
        %v1833 = vand.u32 %v1814, 4294901760
        %1834 = vmatpush1.msra.mxu0 %v1833
        %1835 = vmatprep.subr.mxu0 0.0
        %v1836 = vand.u32 %v1815, 4294901760
        %1837 = vmatpush1.msra.mxu0 %v1836
        %1838 = vmatprep.subr.mxu0 0.0
        %v1839 = vand.u32 %v1816, 4294901760
        %1840 = vmatpush1.msra.mxu0 %v1839
        %1841 = vmatprep.subr.mxu0 0.0
        %v1842 = vand.u32 %v1817, 4294901760
        %1843 = vmatpush1.msra.mxu0 %v1842
        %1844 = vmatprep.subr.mxu0 0.0
        %1845 = vmatpush1.msra.mxu0 0.0
        %1846 = vmatprep.subr.mxu0 0.0
        %1847 = vmatpush1.msra.mxu0 0.0
        %1848 = vmatprep.subr.mxu0 0.0
        %1849 = vmatpush1.msra.mxu0 0.0
        %1850 = vmatprep.subr.mxu0 0.0
        %1851 = vmatpush1.msra.mxu0 0.0
        %1852 = vmatprep.subr.mxu0 0.0
        %1853 = vmatpush1.msra.mxu0 0.0
        %1854 = vmatprep.subr.mxu0 0.0
        %1855 = vmatpush1.msra.mxu0 0.0
        %1856 = vmatprep.subr.mxu0 0.0
        %1857 = vmatpush1.msra.mxu0 0.0
        %1858 = vmatprep.subr.mxu0 0.0
        %1859 = vmatpush1.msra.mxu0 0.0
        %1860 = vmatprep.subr.mxu0 0.0
        %1861 = vmatpush1.msra.mxu0 0.0
        %1862 = vmatprep.subr.mxu0 0.0
        %1863 = vmatpush1.msra.mxu0 0.0
        %1864 = vmatprep.subr.mxu0 0.0
        %1865 = vmatpush1.msra.mxu0 0.0
        %1866 = vmatprep.subr.mxu0 0.0
        %1867 = vmatpush1.msra.mxu0 0.0
        %1868 = vmatprep.subr.mxu0 0.0
        %1869 = vmatpush1.msra.mxu0 0.0
        %1870 = vmatprep.subr.mxu0 0.0
        %1871 = vmatpush1.msra.mxu0 0.0
        %1872 = vmatprep.subr.mxu0 0.0
        %1873 = vmatpush1.msra.mxu0 0.0
        %1874 = vmatprep.subr.mxu0 0.0
        %1875 = vmatpush1.msra.mxu0 0.0
        %1876 = vmatprep.subr.mxu0 0.0
        %1877 = vmatpush1.msra.mxu0 0.0
        %1878 = vmatprep.subr.mxu0 0.0
        %1879 = vmatpush1.msra.mxu0 0.0
        %1880 = vmatprep.subr.mxu0 0.0
        %1881 = vmatpush1.msra.mxu0 0.0
        %1882 = vmatprep.subr.mxu0 0.0
        %1883 = vmatpush1.msra.mxu0 0.0
        %1884 = vmatprep.subr.mxu0 0.0
        %1885 = vmatpush1.msra.mxu0 0.0
        %1886 = vmatprep.subr.mxu0 0.0
        %1887 = vmatpush1.msra.mxu0 0.0
        %1888 = vmatprep.subr.mxu0 0.0
        %1889 = vmatpush1.msra.mxu0 0.0
        %1890 = vmatprep.subr.mxu0 0.0
        %1891 = vmatpush1.msra.mxu0 0.0
        %1892 = vmatprep.subr.mxu0 0.0
        %1893 = vmatpush1.msra.mxu0 0.0
        %1894 = vmatprep.subr.mxu0 0.0
        %1895 = vmatpush1.msra.mxu0 0.0
        %1896 = vmatprep.subr.mxu0 0.0
        %1897 = vmatpush1.msra.mxu0 0.0
        %1898 = vmatprep.subr.mxu0 0.0
        %1899 = vmatpush1.msra.mxu0 0.0
        %1900 = vmatprep.mubr.f32.mxu0 0.0
        %v1901 = vand.u32 %v1830, 4294901760
        %v1902 = vsub.f32 %v1830, %v1901
        %v1903 = vand.u32 %v1902, 4294901760
        %v1904 = vsub.f32 %v1902, %v1903
        %v1905 = vand.u32 %v1904, 4294901760
        %1906 = vmatmul.mubr.f32.gmra.mrb[0].mxu0 %v1905
        %v1907 = vpop.f32.mrb[0].mxu0
        %v1908 = vadd.f32 %v1828, %v1907
        %v1909 = vpop.f32.mrb[0].mxu0
        %1910 = vdwg.mxu0
        %1911 = vmatprep.subr.mxu0 0.0
        %v1912 = vand.u32 %v1814, 4294901760
        %v1913 = vsub.f32 %v1814, %v1912
        %v1914 = vand.u32 %v1913, 4294901760
        %v1915 = vsub.f32 %v1913, %v1914
        %v1916 = vand.u32 %v1915, 4294901760
        %1917 = vmatpush1.msra.mxu0 %v1916
        %1918 = vmatprep.subr.mxu0 0.0
        %v1919 = vand.u32 %v1815, 4294901760
        %v1920 = vsub.f32 %v1815, %v1919
        %v1921 = vand.u32 %v1920, 4294901760
        %v1922 = vsub.f32 %v1920, %v1921
        %v1923 = vand.u32 %v1922, 4294901760
        %1924 = vmatpush1.msra.mxu0 %v1923
        %1925 = vmatprep.subr.mxu0 0.0
        %v1926 = vand.u32 %v1816, 4294901760
        %v1927 = vsub.f32 %v1816, %v1926
        %v1928 = vand.u32 %v1927, 4294901760
        %v1929 = vsub.f32 %v1927, %v1928
        %v1930 = vand.u32 %v1929, 4294901760
        %1931 = vmatpush1.msra.mxu0 %v1930
        %1932 = vmatprep.subr.mxu0 0.0
        %v1933 = vand.u32 %v1817, 4294901760
        %v1934 = vsub.f32 %v1817, %v1933
        %v1935 = vand.u32 %v1934, 4294901760
        %v1936 = vsub.f32 %v1934, %v1935
        %v1937 = vand.u32 %v1936, 4294901760
        %1938 = vmatpush1.msra.mxu0 %v1937
        %1939 = vmatprep.subr.mxu0 0.0
        %1940 = vmatpush1.msra.mxu0 0.0
        %1941 = vmatprep.subr.mxu0 0.0
        %1942 = vmatpush1.msra.mxu0 0.0
        %1943 = vmatprep.subr.mxu0 0.0
        %1944 = vmatpush1.msra.mxu0 0.0
        %1945 = vmatprep.subr.mxu0 0.0
        %1946 = vmatpush1.msra.mxu0 0.0
        %1947 = vmatprep.subr.mxu0 0.0
        %1948 = vmatpush1.msra.mxu0 0.0
        %1949 = vmatprep.subr.mxu0 0.0
        %1950 = vmatpush1.msra.mxu0 0.0
        %1951 = vmatprep.subr.mxu0 0.0
        %1952 = vmatpush1.msra.mxu0 0.0
        %1953 = vmatprep.subr.mxu0 0.0
        %1954 = vmatpush1.msra.mxu0 0.0
        %1955 = vmatprep.subr.mxu0 0.0
        %1956 = vmatpush1.msra.mxu0 0.0
        %1957 = vmatprep.subr.mxu0 0.0
        %1958 = vmatpush1.msra.mxu0 0.0
        %1959 = vmatprep.subr.mxu0 0.0
        %1960 = vmatpush1.msra.mxu0 0.0
        %1961 = vmatprep.subr.mxu0 0.0
        %1962 = vmatpush1.msra.mxu0 0.0
        %1963 = vmatprep.subr.mxu0 0.0
        %1964 = vmatpush1.msra.mxu0 0.0
        %1965 = vmatprep.subr.mxu0 0.0
        %1966 = vmatpush1.msra.mxu0 0.0
        %1967 = vmatprep.subr.mxu0 0.0
        %1968 = vmatpush1.msra.mxu0 0.0
        %1969 = vmatprep.subr.mxu0 0.0
        %1970 = vmatpush1.msra.mxu0 0.0
        %1971 = vmatprep.subr.mxu0 0.0
        %1972 = vmatpush1.msra.mxu0 0.0
        %1973 = vmatprep.subr.mxu0 0.0
        %1974 = vmatpush1.msra.mxu0 0.0
        %1975 = vmatprep.subr.mxu0 0.0
        %1976 = vmatpush1.msra.mxu0 0.0
        %1977 = vmatprep.subr.mxu0 0.0
        %1978 = vmatpush1.msra.mxu0 0.0
        %1979 = vmatprep.subr.mxu0 0.0
        %1980 = vmatpush1.msra.mxu0 0.0
        %1981 = vmatprep.subr.mxu0 0.0
        %1982 = vmatpush1.msra.mxu0 0.0
        %1983 = vmatprep.subr.mxu0 0.0
        %1984 = vmatpush1.msra.mxu0 0.0
        %1985 = vmatprep.subr.mxu0 0.0
        %1986 = vmatpush1.msra.mxu0 0.0
        %1987 = vmatprep.subr.mxu0 0.0
        %1988 = vmatpush1.msra.mxu0 0.0
        %1989 = vmatprep.subr.mxu0 0.0
        %1990 = vmatpush1.msra.mxu0 0.0
        %1991 = vmatprep.subr.mxu0 0.0
        %1992 = vmatpush1.msra.mxu0 0.0
        %1993 = vmatprep.subr.mxu0 0.0
        %1994 = vmatpush1.msra.mxu0 0.0
        %1995 = vmatprep.mubr.f32.mxu0 0.0
        %v1996 = vand.u32 %v1830, 4294901760
        %1997 = vmatmul.mubr.f32.gmra.mrb[0].mxu0 %v1996
        %v1998 = vpop.f32.mrb[0].mxu0
        %v1999 = vadd.f32 %v1908, %v1998
        %v2000 = vpop.f32.mrb[0].mxu0
        %2001 = vdwg.mxu0
        %2002 = vmatprep.subr.mxu0 0.0
        %v2003 = vand.u32 %v1814, 4294901760
        %v2004 = vsub.f32 %v1814, %v2003
        %2005 = vmatpush1.msra.mxu0 %v2004
        %2006 = vmatprep.subr.mxu0 0.0
        %v2007 = vand.u32 %v1815, 4294901760
        %v2008 = vsub.f32 %v1815, %v2007
        %2009 = vmatpush1.msra.mxu0 %v2008
        %2010 = vmatprep.subr.mxu0 0.0
        %v2011 = vand.u32 %v1816, 4294901760
        %v2012 = vsub.f32 %v1816, %v2011
        %2013 = vmatpush1.msra.mxu0 %v2012
        %2014 = vmatprep.subr.mxu0 0.0
        %v2015 = vand.u32 %v1817, 4294901760
        %v2016 = vsub.f32 %v1817, %v2015
        %2017 = vmatpush1.msra.mxu0 %v2016
        %2018 = vmatprep.subr.mxu0 0.0
        %2019 = vmatpush1.msra.mxu0 0.0
        %2020 = vmatprep.subr.mxu0 0.0
        %2021 = vmatpush1.msra.mxu0 0.0
        %2022 = vmatprep.subr.mxu0 0.0
        %2023 = vmatpush1.msra.mxu0 0.0
        %2024 = vmatprep.subr.mxu0 0.0
        %2025 = vmatpush1.msra.mxu0 0.0
        %2026 = vmatprep.subr.mxu0 0.0
        %2027 = vmatpush1.msra.mxu0 0.0
        %2028 = vmatprep.subr.mxu0 0.0
        %2029 = vmatpush1.msra.mxu0 0.0
        %2030 = vmatprep.subr.mxu0 0.0
        %2031 = vmatpush1.msra.mxu0 0.0
        %2032 = vmatprep.subr.mxu0 0.0
        %2033 = vmatpush1.msra.mxu0 0.0
        %2034 = vmatprep.subr.mxu0 0.0
        %2035 = vmatpush1.msra.mxu0 0.0
        %2036 = vmatprep.subr.mxu0 0.0
        %2037 = vmatpush1.msra.mxu0 0.0
        %2038 = vmatprep.subr.mxu0 0.0
        %2039 = vmatpush1.msra.mxu0 0.0
        %2040 = vmatprep.subr.mxu0 0.0
        %2041 = vmatpush1.msra.mxu0 0.0
        %2042 = vmatprep.subr.mxu0 0.0
        %2043 = vmatpush1.msra.mxu0 0.0
        %2044 = vmatprep.subr.mxu0 0.0
        %2045 = vmatpush1.msra.mxu0 0.0
        %2046 = vmatprep.subr.mxu0 0.0
        %2047 = vmatpush1.msra.mxu0 0.0
        %2048 = vmatprep.subr.mxu0 0.0
        %2049 = vmatpush1.msra.mxu0 0.0
        %2050 = vmatprep.subr.mxu0 0.0
        %2051 = vmatpush1.msra.mxu0 0.0
        %2052 = vmatprep.subr.mxu0 0.0
        %2053 = vmatpush1.msra.mxu0 0.0
        %2054 = vmatprep.subr.mxu0 0.0
        %2055 = vmatpush1.msra.mxu0 0.0
        %2056 = vmatprep.subr.mxu0 0.0
        %2057 = vmatpush1.msra.mxu0 0.0
        %2058 = vmatprep.subr.mxu0 0.0
        %2059 = vmatpush1.msra.mxu0 0.0
        %2060 = vmatprep.subr.mxu0 0.0
        %2061 = vmatpush1.msra.mxu0 0.0
        %2062 = vmatprep.subr.mxu0 0.0
        %2063 = vmatpush1.msra.mxu0 0.0
        %2064 = vmatprep.subr.mxu0 0.0
        %2065 = vmatpush1.msra.mxu0 0.0
        %2066 = vmatprep.subr.mxu0 0.0
        %2067 = vmatpush1.msra.mxu0 0.0
        %2068 = vmatprep.subr.mxu0 0.0
        %2069 = vmatpush1.msra.mxu0 0.0
        %2070 = vmatprep.subr.mxu0 0.0
        %2071 = vmatpush1.msra.mxu0 0.0
        %2072 = vmatprep.subr.mxu0 0.0
        %2073 = vmatpush1.msra.mxu0 0.0
        %2074 = vmatprep.mubr.f32.mxu0 0.0
        %v2075 = vand.u32 %v1830, 4294901760
        %v2076 = vsub.f32 %v1830, %v2075
        %2077 = vmatmul.mubr.f32.gmra.mrb[0].mxu0 %v2076
        %v2078 = vpop.f32.mrb[0].mxu0
        %v2079 = vadd.f32 %v1999, %v2078
        %v2080 = vpop.f32.mrb[0].mxu0
        %2081 = vdwg.mxu0
        %2082 = vmatprep.subr.mxu0 0.0
        %v2083 = vand.u32 %v1814, 4294901760
        %2084 = vmatpush1.msra.mxu0 %v2083
        %2085 = vmatprep.subr.mxu0 0.0
        %v2086 = vand.u32 %v1815, 4294901760
        %2087 = vmatpush1.msra.mxu0 %v2086
        %2088 = vmatprep.subr.mxu0 0.0
        %v2089 = vand.u32 %v1816, 4294901760
        %2090 = vmatpush1.msra.mxu0 %v2089
        %2091 = vmatprep.subr.mxu0 0.0
        %v2092 = vand.u32 %v1817, 4294901760
        %2093 = vmatpush1.msra.mxu0 %v2092
        %2094 = vmatprep.subr.mxu0 0.0
        %2095 = vmatpush1.msra.mxu0 0.0
        %2096 = vmatprep.subr.mxu0 0.0
        %2097 = vmatpush1.msra.mxu0 0.0
        %2098 = vmatprep.subr.mxu0 0.0
        %2099 = vmatpush1.msra.mxu0 0.0
        %2100 = vmatprep.subr.mxu0 0.0
        %2101 = vmatpush1.msra.mxu0 0.0
        %2102 = vmatprep.subr.mxu0 0.0
        %2103 = vmatpush1.msra.mxu0 0.0
        %2104 = vmatprep.subr.mxu0 0.0
        %2105 = vmatpush1.msra.mxu0 0.0
        %2106 = vmatprep.subr.mxu0 0.0
        %2107 = vmatpush1.msra.mxu0 0.0
        %2108 = vmatprep.subr.mxu0 0.0
        %2109 = vmatpush1.msra.mxu0 0.0
        %2110 = vmatprep.subr.mxu0 0.0
        %2111 = vmatpush1.msra.mxu0 0.0
        %2112 = vmatprep.subr.mxu0 0.0
        %2113 = vmatpush1.msra.mxu0 0.0
        %2114 = vmatprep.subr.mxu0 0.0
        %2115 = vmatpush1.msra.mxu0 0.0
        %2116 = vmatprep.subr.mxu0 0.0
        %2117 = vmatpush1.msra.mxu0 0.0
        %2118 = vmatprep.subr.mxu0 0.0
        %2119 = vmatpush1.msra.mxu0 0.0
        %2120 = vmatprep.subr.mxu0 0.0
        %2121 = vmatpush1.msra.mxu0 0.0
        %2122 = vmatprep.subr.mxu0 0.0
        %2123 = vmatpush1.msra.mxu0 0.0
        %2124 = vmatprep.subr.mxu0 0.0
        %2125 = vmatpush1.msra.mxu0 0.0
        %2126 = vmatprep.subr.mxu0 0.0
        %2127 = vmatpush1.msra.mxu0 0.0
        %2128 = vmatprep.subr.mxu0 0.0
        %2129 = vmatpush1.msra.mxu0 0.0
        %2130 = vmatprep.subr.mxu0 0.0
        %2131 = vmatpush1.msra.mxu0 0.0
        %2132 = vmatprep.subr.mxu0 0.0
        %2133 = vmatpush1.msra.mxu0 0.0
        %2134 = vmatprep.subr.mxu0 0.0
        %2135 = vmatpush1.msra.mxu0 0.0
        %2136 = vmatprep.subr.mxu0 0.0
        %2137 = vmatpush1.msra.mxu0 0.0
        %2138 = vmatprep.subr.mxu0 0.0
        %2139 = vmatpush1.msra.mxu0 0.0
        %2140 = vmatprep.subr.mxu0 0.0
        %2141 = vmatpush1.msra.mxu0 0.0
        %2142 = vmatprep.subr.mxu0 0.0
        %2143 = vmatpush1.msra.mxu0 0.0
        %2144 = vmatprep.subr.mxu0 0.0
        %2145 = vmatpush1.msra.mxu0 0.0
        %2146 = vmatprep.subr.mxu0 0.0
        %2147 = vmatpush1.msra.mxu0 0.0
        %2148 = vmatprep.subr.mxu0 0.0
        %2149 = vmatpush1.msra.mxu0 0.0
        %2150 = vmatprep.mubr.f32.mxu0 0.0
        %v2151 = vand.u32 %v1830, 4294901760
        %v2152 = vsub.f32 %v1830, %v2151
        %v2153 = vand.u32 %v2152, 4294901760
        %2154 = vmatmul.mubr.f32.gmra.mrb[0].mxu0 %v2153
        %v2155 = vpop.f32.mrb[0].mxu0
        %v2156 = vadd.f32 %v2079, %v2155
        %v2157 = vpop.f32.mrb[0].mxu0
        %2158 = vdwg.mxu0
        %2159 = vmatprep.subr.mxu0 0.0
        %v2160 = vand.u32 %v1814, 4294901760
        %v2161 = vsub.f32 %v1814, %v2160
        %v2162 = vand.u32 %v2161, 4294901760
        %2163 = vmatpush1.msra.mxu0 %v2162
        %2164 = vmatprep.subr.mxu0 0.0
        %v2165 = vand.u32 %v1815, 4294901760
        %v2166 = vsub.f32 %v1815, %v2165
        %v2167 = vand.u32 %v2166, 4294901760
        %2168 = vmatpush1.msra.mxu0 %v2167
        %2169 = vmatprep.subr.mxu0 0.0
        %v2170 = vand.u32 %v1816, 4294901760
        %v2171 = vsub.f32 %v1816, %v2170
        %v2172 = vand.u32 %v2171, 4294901760
        %2173 = vmatpush1.msra.mxu0 %v2172
        %2174 = vmatprep.subr.mxu0 0.0
        %v2175 = vand.u32 %v1817, 4294901760
        %v2176 = vsub.f32 %v1817, %v2175
        %v2177 = vand.u32 %v2176, 4294901760
        %2178 = vmatpush1.msra.mxu0 %v2177
        %2179 = vmatprep.subr.mxu0 0.0
        %2180 = vmatpush1.msra.mxu0 0.0
        %2181 = vmatprep.subr.mxu0 0.0
        %2182 = vmatpush1.msra.mxu0 0.0
        %2183 = vmatprep.subr.mxu0 0.0
        %2184 = vmatpush1.msra.mxu0 0.0
        %2185 = vmatprep.subr.mxu0 0.0
        %2186 = vmatpush1.msra.mxu0 0.0
        %2187 = vmatprep.subr.mxu0 0.0
        %2188 = vmatpush1.msra.mxu0 0.0
        %2189 = vmatprep.subr.mxu0 0.0
        %2190 = vmatpush1.msra.mxu0 0.0
        %2191 = vmatprep.subr.mxu0 0.0
        %2192 = vmatpush1.msra.mxu0 0.0
        %2193 = vmatprep.subr.mxu0 0.0
        %2194 = vmatpush1.msra.mxu0 0.0
        %2195 = vmatprep.subr.mxu0 0.0
        %2196 = vmatpush1.msra.mxu0 0.0
        %2197 = vmatprep.subr.mxu0 0.0
        %2198 = vmatpush1.msra.mxu0 0.0
        %2199 = vmatprep.subr.mxu0 0.0
        %2200 = vmatpush1.msra.mxu0 0.0
        %2201 = vmatprep.subr.mxu0 0.0
        %2202 = vmatpush1.msra.mxu0 0.0
        %2203 = vmatprep.subr.mxu0 0.0
        %2204 = vmatpush1.msra.mxu0 0.0
        %2205 = vmatprep.subr.mxu0 0.0
        %2206 = vmatpush1.msra.mxu0 0.0
        %2207 = vmatprep.subr.mxu0 0.0
        %2208 = vmatpush1.msra.mxu0 0.0
        %2209 = vmatprep.subr.mxu0 0.0
        %2210 = vmatpush1.msra.mxu0 0.0
        %2211 = vmatprep.subr.mxu0 0.0
        %2212 = vmatpush1.msra.mxu0 0.0
        %2213 = vmatprep.subr.mxu0 0.0
        %2214 = vmatpush1.msra.mxu0 0.0
        %2215 = vmatprep.subr.mxu0 0.0
        %2216 = vmatpush1.msra.mxu0 0.0
        %2217 = vmatprep.subr.mxu0 0.0
        %2218 = vmatpush1.msra.mxu0 0.0
        %2219 = vmatprep.subr.mxu0 0.0
        %2220 = vmatpush1.msra.mxu0 0.0
        %2221 = vmatprep.subr.mxu0 0.0
        %2222 = vmatpush1.msra.mxu0 0.0
        %2223 = vmatprep.subr.mxu0 0.0
        %2224 = vmatpush1.msra.mxu0 0.0
        %2225 = vmatprep.subr.mxu0 0.0
        %2226 = vmatpush1.msra.mxu0 0.0
        %2227 = vmatprep.subr.mxu0 0.0
        %2228 = vmatpush1.msra.mxu0 0.0
        %2229 = vmatprep.subr.mxu0 0.0
        %2230 = vmatpush1.msra.mxu0 0.0
        %2231 = vmatprep.subr.mxu0 0.0
        %2232 = vmatpush1.msra.mxu0 0.0
        %2233 = vmatprep.subr.mxu0 0.0
        %2234 = vmatpush1.msra.mxu0 0.0
        %2235 = vmatprep.mubr.f32.mxu0 0.0
        %v2236 = vand.u32 %v1830, 4294901760
        %2237 = vmatmul.mubr.f32.gmra.mrb[0].mxu0 %v2236
        %v2238 = vpop.f32.mrb[0].mxu0
        %v2239 = vadd.f32 %v2156, %v2238
        %v2240 = vpop.f32.mrb[0].mxu0
        %2241 = vdwg.mxu0
        %2242 = vmatprep.subr.mxu0 0.0
        %v2243 = vand.u32 %v1814, 4294901760
        %2244 = vmatpush1.msra.mxu0 %v2243
        %2245 = vmatprep.subr.mxu0 0.0
        %v2246 = vand.u32 %v1815, 4294901760
        %2247 = vmatpush1.msra.mxu0 %v2246
        %2248 = vmatprep.subr.mxu0 0.0
        %v2249 = vand.u32 %v1816, 4294901760
        %2250 = vmatpush1.msra.mxu0 %v2249
        %2251 = vmatprep.subr.mxu0 0.0
        %v2252 = vand.u32 %v1817, 4294901760
        %2253 = vmatpush1.msra.mxu0 %v2252
        %2254 = vmatprep.subr.mxu0 0.0
        %2255 = vmatpush1.msra.mxu0 0.0
        %2256 = vmatprep.subr.mxu0 0.0
        %2257 = vmatpush1.msra.mxu0 0.0
        %2258 = vmatprep.subr.mxu0 0.0
        %2259 = vmatpush1.msra.mxu0 0.0
        %2260 = vmatprep.subr.mxu0 0.0
        %2261 = vmatpush1.msra.mxu0 0.0
        %2262 = vmatprep.subr.mxu0 0.0
        %2263 = vmatpush1.msra.mxu0 0.0
        %2264 = vmatprep.subr.mxu0 0.0
        %2265 = vmatpush1.msra.mxu0 0.0
        %2266 = vmatprep.subr.mxu0 0.0
        %2267 = vmatpush1.msra.mxu0 0.0
        %2268 = vmatprep.subr.mxu0 0.0
        %2269 = vmatpush1.msra.mxu0 0.0
        %2270 = vmatprep.subr.mxu0 0.0
        %2271 = vmatpush1.msra.mxu0 0.0
        %2272 = vmatprep.subr.mxu0 0.0
        %2273 = vmatpush1.msra.mxu0 0.0
        %2274 = vmatprep.subr.mxu0 0.0
        %2275 = vmatpush1.msra.mxu0 0.0
        %2276 = vmatprep.subr.mxu0 0.0
        %2277 = vmatpush1.msra.mxu0 0.0
        %2278 = vmatprep.subr.mxu0 0.0
        %2279 = vmatpush1.msra.mxu0 0.0
        %2280 = vmatprep.subr.mxu0 0.0
        %2281 = vmatpush1.msra.mxu0 0.0
        %2282 = vmatprep.subr.mxu0 0.0
        %2283 = vmatpush1.msra.mxu0 0.0
        %2284 = vmatprep.subr.mxu0 0.0
        %2285 = vmatpush1.msra.mxu0 0.0
        %2286 = vmatprep.subr.mxu0 0.0
        %2287 = vmatpush1.msra.mxu0 0.0
        %2288 = vmatprep.subr.mxu0 0.0
        %2289 = vmatpush1.msra.mxu0 0.0
        %2290 = vmatprep.subr.mxu0 0.0
        %2291 = vmatpush1.msra.mxu0 0.0
        %2292 = vmatprep.subr.mxu0 0.0
        %2293 = vmatpush1.msra.mxu0 0.0
        %2294 = vmatprep.subr.mxu0 0.0
        %2295 = vmatpush1.msra.mxu0 0.0
        %2296 = vmatprep.subr.mxu0 0.0
        %2297 = vmatpush1.msra.mxu0 0.0
        %2298 = vmatprep.subr.mxu0 0.0
        %2299 = vmatpush1.msra.mxu0 0.0
        %2300 = vmatprep.subr.mxu0 0.0
        %2301 = vmatpush1.msra.mxu0 0.0
        %2302 = vmatprep.subr.mxu0 0.0
        %2303 = vmatpush1.msra.mxu0 0.0
        %2304 = vmatprep.subr.mxu0 0.0
        %2305 = vmatpush1.msra.mxu0 0.0
        %2306 = vmatprep.subr.mxu0 0.0
        %2307 = vmatpush1.msra.mxu0 0.0
        %2308 = vmatprep.subr.mxu0 0.0
        %2309 = vmatpush1.msra.mxu0 0.0
        %2310 = vmatprep.mubr.f32.mxu0 0.0
        %v2311 = vand.u32 %v1830, 4294901760
        %2312 = vmatmul.mubr.f32.gmra.mrb[0].mxu0 %v2311
        %v2313 = vpop.f32.mrb[0].mxu0
        %v2314 = vadd.f32 %v2239, %v2313
        %v2315 = vpop.f32.mrb[0].mxu0
        %2316 = vdwg.mxu0
        %2317 = vst [vmem:[%s273] sm:$0x1] %v2314
        %s2318 = sand.u32 %s183, 1
        %s2319 = scalar_lea.sflag [#allocation4], %s2318
        %s2320 = sand.u32 %s183, 1
        %s2321 = scalar_lea.vmem [#allocation3], %s2320
        // Predicated region
        $region49: #{tpu_custom_call.1} parent=47 // pred_check
          %p2322 = pneg %p193
        $region50: #{tpu_custom_call.1} parent=47 // pred_check_branch
          %2324 = sbr.rel (%p2322) target = $region52
        $region51: #{tpu_custom_call.1} parent=47 // pred_region
          %s2326 = ssub.s32 16, 16
          %2327 = vsyncadd %s2319, %s2326
          %s2328 = smul.addr %s23, 16
          %s2329 = scalar_lea.hbm %s7, %s2328
          %s2331 = sshll.u32 %s2321, 4
          %s2332 = int_to_ptr.vmem [resolvable:$true] %s2331
          %2334 = dma.vmem_to_hbm [thread:$0]  %s2332, 16, %s2329, %s2319
        $region52: #{tpu_custom_call.1} parent=47 // pred_fallthru
          _
      $region48: #{tpu_custom_call.1} parent=5 // pred_fallthru
        _
      %p2335 = scmp.le.s32.totalorder 2, %s18
      // Predicated region
      $region53: #{tpu_custom_call.1} parent=5 // pred_check
        %p2336 = pneg %p2335
      $region54: #{tpu_custom_call.1} parent=5 // pred_check_branch
        %2338 = sbr.rel (%p2336) target = $region56
      $region55: #{tpu_custom_call.1} parent=5 // pred_region
        %s2339 = ssub.s32 %s18, 2
        // Predicated region
        $region57: #{tpu_custom_call.1} parent=55 // pred_check
          %p2340 = pneg %p199
        $region58: #{tpu_custom_call.1} parent=55 // pred_check_branch
          %2342 = sbr.rel (%p2340) target = $region60
        $region59: #{tpu_custom_call.1} parent=55 // pred_region
          %s2343 = sand.u32 %s184, 1
          %s2344 = scalar_lea.sflag [#allocation4], %s2343
          %s2345 = sand.u32 %s184, 1
          %s2346 = scalar_lea.vmem [#allocation3], %s2345
          %2347 = dma.done %s2344, 16
        $region60: #{tpu_custom_call.1} parent=55 // pred_fallthru
          _
      $region56: #{tpu_custom_call.1} parent=5 // pred_fallthru
        _
    $region6: #{tpu_custom_call.1} parent=1 // loop_footer
      %s22 = sadd.s32 1, %s18
    $region7: #{tpu_custom_call.1} parent=1 // loop_footer_branch
      %17 = sbr.rel target = $region3
    $region8: #{tpu_custom_call.1} parent=1 // loop_exit
      _
    %2348 = vsyncpa [#allocation4], 1
    %s2349 = scalar_lea.sflag [#allocation4], 1
    %2350 = vsyncpa %s2349, 1

</llo_original>
